<compile_context>
chip_gen: v7x
topology: tpu7x:2x2x1
jax: 0.10.0
libtpu: 0.0.40
codegen_flags: <defaults>
</compile_context>

<pallas_src>
import jax
import jax.numpy as jnp
from jax import lax
from jax.experimental import pallas as pl
from jax.experimental.pallas import tpu as pltpu


def _round_up(v, m):
    return ((v + m - 1) // m) * m


def teacher_forward(x_nchw, wc_oihw, bc, wfc, bfc, *, batch_block=128):
    """Pallas-TPU implementation of TeacherModel.forward.

    x_nchw : (N, 3, H, W)   input images
    wc_oihw: (C, 3, 3, 3)   conv1 weight
    bc     : (C,)           conv1 bias
    wfc    : (ncls, C*16)   fc1 weight
    bfc    : (ncls,)        fc1 bias
    """
    N, cin, H, W = x_nchw.shape
    assert cin == 3, "TeacherModel.conv1 expects 3 input channels"
    assert H % 2 == 0 and W % 2 == 0
    Hm, Wm = H // 2, W // 2
    # TODO(synk): non-divisible AdaptiveAvgPool2d((4,4)) windows (Hm % 4 != 0) are
    # not supported by this kernel (PyTorch would use ragged windows there).
    assert Hm % 4 == 0 and Wm % 4 == 0, "adaptive pool window must be exact"
    ah, aw = Hm // 4, Wm // 4
    C = wc_oihw.shape[0]
    ncls = wfc.shape[0]

    Hp, Wp = H + 2, W + 2                      # zero-padded conv input extent
    Hpad = _round_up(Hp, 8)                    # rows per image (sublane aligned)
    Lp = _round_up(Wp * 3, 128)                # input lanes  = (w_in, cin)
    LOUT = _round_up(W * C, 128)               # conv lanes   = (wp, j, dj, c)
    LH = Wm * C                                # lanes after the wp-max = (j, dj, c)
    NCLS_PAD = _round_up(ncls, 128)

    # ---- batch blocking: >= 2 blocks when possible (v7x megacore), NB % 8 == 0 ----
    if N <= 2 * batch_block:
        NB = min(_round_up(max(1, -(-N // 2)), 8), _round_up(N, 8))
    else:
        NB = batch_block
    NB = max(NB, 8)
    nblocks = -(-N // NB)
    N_pad = nblocks * NB
    TAIL = 16                                  # zero rows at the end of each block
    RT = NB * Hpad + TAIL                      # streamed rows per input block

    # ---- layout glue (bytes ~ raw image; pure layout plumbing done once by XLA) ----
    x = jnp.transpose(x_nchw, (0, 2, 3, 1)).astype(jnp.bfloat16)           # NHWC
    x = jnp.pad(x, ((0, N_pad - N), (1, Hpad - H - 1), (1, 1), (0, 0)))
    xin = x.reshape(N_pad, Hpad, Wp * 3)
    xin = jnp.pad(xin, ((0, 0), (0, 0), (0, Lp - Wp * 3)))
    xin = xin.reshape(nblocks, NB * Hpad, Lp)
    xin = jnp.pad(xin, ((0, 0), (0, TAIL), (0, 0)))                        # (nblocks, RT, Lp)

    # conv weight -> 3 banded matrices WB[ky] : row (w_in*3+ci) -> lane (wp, j, dj, c)
    wk = jnp.transpose(wc_oihw, (2, 3, 1, 0)).astype(jnp.float32)          # (ky, kx, ci, co)
    sel = jnp.stack([jnp.eye(Wp, W, k=-kx, dtype=jnp.float32) for kx in range(3)])
    wb = jnp.einsum('xuw,yxco->yucwo', sel, wk)                            # (3, Wp, 3, W, C)
    wb = wb.reshape(3, Wp * 3, 4, aw, 2, C)                                # w_out = (j, dj, wp)
    wb = wb.transpose(0, 1, 4, 2, 3, 5).reshape(3, Wp * 3, W * C)
    wb = jnp.pad(wb, ((0, 0), (0, Lp - Wp * 3), (0, LOUT - W * C))).astype(jnp.bfloat16)

    bcl = jnp.pad(jnp.tile(bc.astype(jnp.float32), W), (0, LOUT - W * C)).reshape(1, LOUT)

    # fc1 weight with the dj-average and the PyTorch (c, i, j) flatten folded in:
    #   G[i, j*aw*C + dj*C + c, cls] = wfc[cls, c*16 + i*4 + j] / (ah*aw)
    g = jnp.transpose(wfc.astype(jnp.float32).reshape(ncls, C, 4, 4), (2, 3, 1, 0))
    g = jnp.broadcast_to(g[:, :, None, :, :], (4, 4, aw, C, ncls)) / float(ah * aw)
    g = g.reshape(4, LH, ncls)
    g = jnp.pad(g, ((0, 0), (0, 0), (0, NCLS_PAD - ncls))).astype(jnp.bfloat16)

    bfl = jnp.pad(bfc.astype(jnp.float32), (0, NCLS_PAD - ncls)).reshape(1, NCLS_PAD)

    RR = NB * Hpad          # row r = n * Hpad + h  (h = padded image row)
    V = RR + 1              # conv rows computed so the hp-max pairs stay in range

    def kernel(x_ref, wb_ref, bc_ref, g_ref, bf_ref, o_ref):
        xf = x_ref[0]                                               # (RT, Lp) bf16

        # conv2d(3x3, pad=1) + bias + ReLU: 3 banded bf16 matmuls on ky-shifted views.
        acc = jnp.dot(xf[0:V], wb_ref[0], preferred_element_type=jnp.float32)
        acc = acc + jnp.dot(xf[1:V + 1], wb_ref[1], preferred_element_type=jnp.float32)
        acc = acc + jnp.dot(xf[2:V + 2], wb_ref[2], preferred_element_type=jnp.float32)
        y = jnp.maximum(acc + bc_ref[...], 0.0)                     # (V, LOUT) f32

        # maxpool(2,2): wp lives in the two lane halves, hp in adjacent rows.
        m2 = jnp.maximum(y[:, 0:LH], y[:, LH:2 * LH])               # (V, LH)
        mh = jnp.maximum(m2[0:RR], m2[1:RR + 1])                    # (RR, LH); valid at even h
        mh3 = mh.reshape(NB, Hpad, LH)

        # adaptive_avg_pool2d((4,4)): di-sum per band i (dj-mean folded into g),
        # then fc1 as 4 band matmuls; one lane-dense (NB, 128) output store.
        out = None
        for i in range(4):
            band = mh3[:, 2 * i * ah, :]
            for di in range(1, ah):
                band = band + mh3[:, 2 * (i * ah + di), :]
            t = jnp.dot(band.astype(g_ref.dtype), g_ref[i],
                        preferred_element_type=jnp.float32)
            out = t if i == 0 else out + t
        o_ref[...] = (out + bf_ref[...]).astype(o_ref.dtype)

    flops = nblocks * (2 * 3 * V * Lp * LOUT + 2 * 4 * NB * LH * NCLS_PAD)
    bytes_accessed = (xin.size * 2 + wb.size * 2 + g.size * 2
                      + bcl.size * 4 + bfl.size * 4 + N_pad * NCLS_PAD * 4)

    out = pl.pallas_call(
        kernel,
        out_shape=jax.ShapeDtypeStruct((N_pad, NCLS_PAD), jnp.float32),
        grid_spec=pltpu.PrefetchScalarGridSpec(
            num_scalar_prefetch=0,
            grid=(nblocks,),
            in_specs=[
                pl.BlockSpec((1, RT, Lp), lambda b: (b, 0, 0)),        # raw image block
                pl.BlockSpec((3, Lp, LOUT), lambda b: (0, 0, 0)),      # banded conv weight
                pl.BlockSpec((1, LOUT), lambda b: (0, 0)),             # conv bias (lanes)
                pl.BlockSpec((4, LH, NCLS_PAD), lambda b: (0, 0, 0)),  # fused avg+fc weight
                pl.BlockSpec((1, NCLS_PAD), lambda b: (0, 0)),         # fc bias
            ],
            out_specs=pl.BlockSpec((NB, NCLS_PAD), lambda b: (b, 0)),
        ),
        compiler_params=pltpu.CompilerParams(
            dimension_semantics=("parallel",),
            vmem_limit_bytes=48 * 1024 * 1024),
        cost_estimate=pl.CostEstimate(
            flops=int(flops), transcendentals=0, bytes_accessed=int(bytes_accessed)),
    )(xin, wb, bcl, g, bfl)

    return out[:N, :ncls]


def teacher_forward_ref(x_nchw, wc_oihw, bc, wfc, bfc):
    """Pure-JAX f32 reference matching the PyTorch module exactly."""
    y = lax.conv_general_dilated(
        x_nchw.astype(jnp.float32), wc_oihw.astype(jnp.float32),
        window_strides=(1, 1), padding=((1, 1), (1, 1)),
        dimension_numbers=("NCHW", "OIHW", "NCHW"))
    y = jnp.maximum(y + bc[None, :, None, None], 0.0)
    y = lax.reduce_window(y, -jnp.inf, lax.max, (1, 1, 2, 2), (1, 1, 2, 2), "VALID")
    kh, kw = y.shape[2] // 4, y.shape[3] // 4
    y = lax.reduce_window(y, 0.0, lax.add, (1, 1, kh, kw), (1, 1, kh, kw), "VALID") / (kh * kw)
    y = y.reshape(y.shape[0], -1)          # NCHW flatten == x.view(-1, C*16)
    return y @ wfc.T + bfc


if __name__ == "__main__":
    in_features = 8      # conv out channels
    num_classes = 10
    N, H, W = 2, 16, 16

    key = jax.random.PRNGKey(0)
    kx, kwc, kbc, kwf, kbf = jax.random.split(key, 5)
    x = jax.random.normal(kx, (N, 3, H, W), jnp.float32)
    wc = jax.random.normal(kwc, (in_features, 3, 3, 3), jnp.float32) * 0.1
    bc = jax.random.normal(kbc, (in_features,), jnp.float32) * 0.1
    wfc = jax.random.normal(kwf, (num_classes, in_features * 16), jnp.float32) * 0.1
    bfc = jax.random.normal(kbf, (num_classes,), jnp.float32) * 0.1

    out = jax.block_until_ready(teacher_forward(x, wc, bc, wfc, bfc))
    ref = jax.block_until_ready(teacher_forward_ref(x, wc, bc, wfc, bfc))
    assert out.shape == (N, num_classes)
    # bf16 matmul operands -> loosened tolerance vs the f32 reference.
    if not jnp.allclose(out, ref, atol=3e-2, rtol=3e-2):
        raise AssertionError(
            f"mismatch vs reference, max abs diff = {float(jnp.max(jnp.abs(out - ref)))}")
    print("KERNEL_OK")
</pallas_src>

<mosaic_0001>
module attributes {stable_mosaic.version = 11 : i64} {
  func.func @kernel(%arg0: i32, %arg1: memref<1x208x128xbf16, #tpu.memory_space<vmem>>, %arg2: memref<3x128x128xbf16, #tpu.memory_space<vmem>>, %arg3: memref<1x128xf32, #tpu.memory_space<vmem>>, %arg4: memref<4x64x128xbf16, #tpu.memory_space<vmem>>, %arg5: memref<1x128xf32, #tpu.memory_space<vmem>>, %arg6: memref<8x128xf32, #tpu.memory_space<vmem>>) attributes {dimension_semantics = [#tpu.dimension_semantics<parallel>], iteration_bounds = array<i64: 1>, scalar_prefetch = 0 : i64, scratch_operands = 0 : i64, tpu.core_type = #tpu.core_type<tc>, window_params = [{transform_indices = @transform_0, window_bounds = array<i64: 1, 208, 128>}, {pipeline_mode = #tpu.pipeline_mode<synchronous>, transform_indices = @transform_1, window_bounds = array<i64: 3, 128, 128>}, {pipeline_mode = #tpu.pipeline_mode<synchronous>, transform_indices = @transform_2, window_bounds = array<i64: 1, 128>}, {pipeline_mode = #tpu.pipeline_mode<synchronous>, transform_indices = @transform_3, window_bounds = array<i64: 4, 64, 128>}, {pipeline_mode = #tpu.pipeline_mode<synchronous>, transform_indices = @transform_4, window_bounds = array<i64: 1, 128>}, {transform_indices = @transform_5, window_bounds = array<i64: 8, 128>}]} {
    %c0 = arith.constant 0 : index
    %c0_0 = arith.constant 0 : index
    %c0_1 = arith.constant 0 : index
    %0 = vector.load %arg1[%c0, %c0_0, %c0_1] : memref<1x208x128xbf16, #tpu.memory_space<vmem>>, vector<1x208x128xbf16>
    %1 = vector.shape_cast %0 : vector<1x208x128xbf16> to vector<208x128xbf16>
    %2 = vector.extract_strided_slice %1 {offsets = [0, 0], sizes = [193, 128], strides = [1, 1]} : vector<208x128xbf16> to vector<193x128xbf16>
    %c0_2 = arith.constant 0 : index
    %c0_3 = arith.constant 0 : index
    %c0_4 = arith.constant 0 : index
    %3 = vector.load %arg2[%c0_2, %c0_3, %c0_4] : memref<3x128x128xbf16, #tpu.memory_space<vmem>>, vector<1x128x128xbf16>
    %4 = vector.shape_cast %3 : vector<1x128x128xbf16> to vector<128x128xbf16>
    %cst = arith.constant dense<0.000000e+00> : vector<193x128xf32>
    %5 = tpu.matmul %2, %4, %cst {dimension_numbers = #tpu.dot_dimension_numbers<[1], [0], [0], [1], [0, 0, 1, 1], [], []>} : vector<193x128xbf16>, vector<128x128xbf16>, vector<193x128xf32> -> vector<193x128xf32>
    %6 = vector.extract_strided_slice %1 {offsets = [1, 0], sizes = [193, 128], strides = [1, 1]} : vector<208x128xbf16> to vector<193x128xbf16>
    %c1 = arith.constant 1 : index
    %c0_5 = arith.constant 0 : index
    %c0_6 = arith.constant 0 : index
    %7 = vector.load %arg2[%c1, %c0_5, %c0_6] : memref<3x128x128xbf16, #tpu.memory_space<vmem>>, vector<1x128x128xbf16>
    %8 = vector.shape_cast %7 : vector<1x128x128xbf16> to vector<128x128xbf16>
    %cst_7 = arith.constant dense<0.000000e+00> : vector<193x128xf32>
    %9 = tpu.matmul %6, %8, %cst_7 {dimension_numbers = #tpu.dot_dimension_numbers<[1], [0], [0], [1], [0, 0, 1, 1], [], []>} : vector<193x128xbf16>, vector<128x128xbf16>, vector<193x128xf32> -> vector<193x128xf32>
    %10 = arith.addf %5, %9 : vector<193x128xf32>
    %11 = vector.extract_strided_slice %1 {offsets = [2, 0], sizes = [193, 128], strides = [1, 1]} : vector<208x128xbf16> to vector<193x128xbf16>
    %c2 = arith.constant 2 : index
    %c0_8 = arith.constant 0 : index
    %c0_9 = arith.constant 0 : index
    %12 = vector.load %arg2[%c2, %c0_8, %c0_9] : memref<3x128x128xbf16, #tpu.memory_space<vmem>>, vector<1x128x128xbf16>
    %13 = vector.shape_cast %12 : vector<1x128x128xbf16> to vector<128x128xbf16>
    %cst_10 = arith.constant dense<0.000000e+00> : vector<193x128xf32>
    %14 = tpu.matmul %11, %13, %cst_10 {dimension_numbers = #tpu.dot_dimension_numbers<[1], [0], [0], [1], [0, 0, 1, 1], [], []>} : vector<193x128xbf16>, vector<128x128xbf16>, vector<193x128xf32> -> vector<193x128xf32>
    %15 = arith.addf %10, %14 : vector<193x128xf32>
    %c0_11 = arith.constant 0 : index
    %c0_12 = arith.constant 0 : index
    %16 = vector.load %arg3[%c0_11, %c0_12] : memref<1x128xf32, #tpu.memory_space<vmem>>, vector<1x128xf32>
    %17 = vector.broadcast %16 : vector<1x128xf32> to vector<193x128xf32>
    %18 = arith.addf %15, %17 : vector<193x128xf32>
    %cst_13 = arith.constant 0.000000e+00 : f32
    %19 = vector.broadcast %cst_13 : f32 to vector<193x128xf32>
    %20 = arith.maximumf %18, %19 : vector<193x128xf32>
    %21 = vector.extract_strided_slice %20 {offsets = [0, 0], sizes = [193, 64], strides = [1, 1]} : vector<193x128xf32> to vector<193x64xf32>
    %22 = vector.extract_strided_slice %20 {offsets = [0, 64], sizes = [193, 64], strides = [1, 1]} : vector<193x128xf32> to vector<193x64xf32>
    %23 = arith.maximumf %21, %22 : vector<193x64xf32>
    %24 = vector.extract_strided_slice %23 {offsets = [0, 0], sizes = [192, 64], strides = [1, 1]} : vector<193x64xf32> to vector<192x64xf32>
    %25 = vector.extract_strided_slice %23 {offsets = [1, 0], sizes = [192, 64], strides = [1, 1]} : vector<193x64xf32> to vector<192x64xf32>
    %26 = arith.maximumf %24, %25 : vector<192x64xf32>
    %27 = vector.shape_cast %26 : vector<192x64xf32> to vector<8x24x64xf32>
    %28 = vector.extract_strided_slice %27 {offsets = [0, 0, 0], sizes = [8, 1, 64], strides = [1, 1, 1]} : vector<8x24x64xf32> to vector<8x1x64xf32>
    %29 = vector.shape_cast %28 : vector<8x1x64xf32> to vector<8x64xf32>
    %30 = vector.extract_strided_slice %27 {offsets = [0, 2, 0], sizes = [8, 1, 64], strides = [1, 1, 1]} : vector<8x24x64xf32> to vector<8x1x64xf32>
    %31 = vector.shape_cast %30 : vector<8x1x64xf32> to vector<8x64xf32>
    %32 = arith.addf %29, %31 : vector<8x64xf32>
    %33 = arith.truncf %32 : vector<8x64xf32> to vector<8x64xbf16>
    %c0_14 = arith.constant 0 : index
    %c0_15 = arith.constant 0 : index
    %c0_16 = arith.constant 0 : index
    %34 = vector.load %arg4[%c0_14, %c0_15, %c0_16] : memref<4x64x128xbf16, #tpu.memory_space<vmem>>, vector<1x64x128xbf16>
    %35 = vector.shape_cast %34 : vector<1x64x128xbf16> to vector<64x128xbf16>
    %cst_17 = arith.constant dense<0.000000e+00> : vector<8x128xf32>
    %36 = tpu.matmul %33, %35, %cst_17 {dimension_numbers = #tpu.dot_dimension_numbers<[1], [0], [0], [1], [0, 0, 1, 1], [], []>} : vector<8x64xbf16>, vector<64x128xbf16>, vector<8x128xf32> -> vector<8x128xf32>
    %37 = vector.extract_strided_slice %27 {offsets = [0, 4, 0], sizes = [8, 1, 64], strides = [1, 1, 1]} : vector<8x24x64xf32> to vector<8x1x64xf32>
    %38 = vector.shape_cast %37 : vector<8x1x64xf32> to vector<8x64xf32>
    %39 = vector.extract_strided_slice %27 {offsets = [0, 6, 0], sizes = [8, 1, 64], strides = [1, 1, 1]} : vector<8x24x64xf32> to vector<8x1x64xf32>
    %40 = vector.shape_cast %39 : vector<8x1x64xf32> to vector<8x64xf32>
    %41 = arith.addf %38, %40 : vector<8x64xf32>
    %42 = arith.truncf %41 : vector<8x64xf32> to vector<8x64xbf16>
    %c1_18 = arith.constant 1 : index
    %c0_19 = arith.constant 0 : index
    %c0_20 = arith.constant 0 : index
    %43 = vector.load %arg4[%c1_18, %c0_19, %c0_20] : memref<4x64x128xbf16, #tpu.memory_space<vmem>>, vector<1x64x128xbf16>
    %44 = vector.shape_cast %43 : vector<1x64x128xbf16> to vector<64x128xbf16>
    %cst_21 = arith.constant dense<0.000000e+00> : vector<8x128xf32>
    %45 = tpu.matmul %42, %44, %cst_21 {dimension_numbers = #tpu.dot_dimension_numbers<[1], [0], [0], [1], [0, 0, 1, 1], [], []>} : vector<8x64xbf16>, vector<64x128xbf16>, vector<8x128xf32> -> vector<8x128xf32>
    %46 = arith.addf %36, %45 : vector<8x128xf32>
    %47 = vector.extract_strided_slice %27 {offsets = [0, 8, 0], sizes = [8, 1, 64], strides = [1, 1, 1]} : vector<8x24x64xf32> to vector<8x1x64xf32>
    %48 = vector.shape_cast %47 : vector<8x1x64xf32> to vector<8x64xf32>
    %49 = vector.extract_strided_slice %27 {offsets = [0, 10, 0], sizes = [8, 1, 64], strides = [1, 1, 1]} : vector<8x24x64xf32> to vector<8x1x64xf32>
    %50 = vector.shape_cast %49 : vector<8x1x64xf32> to vector<8x64xf32>
    %51 = arith.addf %48, %50 : vector<8x64xf32>
    %52 = arith.truncf %51 : vector<8x64xf32> to vector<8x64xbf16>
    %c2_22 = arith.constant 2 : index
    %c0_23 = arith.constant 0 : index
    %c0_24 = arith.constant 0 : index
    %53 = vector.load %arg4[%c2_22, %c0_23, %c0_24] : memref<4x64x128xbf16, #tpu.memory_space<vmem>>, vector<1x64x128xbf16>
    %54 = vector.shape_cast %53 : vector<1x64x128xbf16> to vector<64x128xbf16>
    %cst_25 = arith.constant dense<0.000000e+00> : vector<8x128xf32>
    %55 = tpu.matmul %52, %54, %cst_25 {dimension_numbers = #tpu.dot_dimension_numbers<[1], [0], [0], [1], [0, 0, 1, 1], [], []>} : vector<8x64xbf16>, vector<64x128xbf16>, vector<8x128xf32> -> vector<8x128xf32>
    %56 = arith.addf %46, %55 : vector<8x128xf32>
    %57 = vector.extract_strided_slice %27 {offsets = [0, 12, 0], sizes = [8, 1, 64], strides = [1, 1, 1]} : vector<8x24x64xf32> to vector<8x1x64xf32>
    %58 = vector.shape_cast %57 : vector<8x1x64xf32> to vector<8x64xf32>
    %59 = vector.extract_strided_slice %27 {offsets = [0, 14, 0], sizes = [8, 1, 64], strides = [1, 1, 1]} : vector<8x24x64xf32> to vector<8x1x64xf32>
    %60 = vector.shape_cast %59 : vector<8x1x64xf32> to vector<8x64xf32>
    %61 = arith.addf %58, %60 : vector<8x64xf32>
    %62 = arith.truncf %61 : vector<8x64xf32> to vector<8x64xbf16>
    %c3 = arith.constant 3 : index
    %c0_26 = arith.constant 0 : index
    %c0_27 = arith.constant 0 : index
    %63 = vector.load %arg4[%c3, %c0_26, %c0_27] : memref<4x64x128xbf16, #tpu.memory_space<vmem>>, vector<1x64x128xbf16>
    %64 = vector.shape_cast %63 : vector<1x64x128xbf16> to vector<64x128xbf16>
    %cst_28 = arith.constant dense<0.000000e+00> : vector<8x128xf32>
    %65 = tpu.matmul %62, %64, %cst_28 {dimension_numbers = #tpu.dot_dimension_numbers<[1], [0], [0], [1], [0, 0, 1, 1], [], []>} : vector<8x64xbf16>, vector<64x128xbf16>, vector<8x128xf32> -> vector<8x128xf32>
    %66 = arith.addf %56, %65 : vector<8x128xf32>
    %c0_29 = arith.constant 0 : index
    %c0_30 = arith.constant 0 : index
    %67 = vector.load %arg5[%c0_29, %c0_30] : memref<1x128xf32, #tpu.memory_space<vmem>>, vector<1x128xf32>
    %68 = vector.broadcast %67 : vector<1x128xf32> to vector<8x128xf32>
    %69 = arith.addf %66, %68 : vector<8x128xf32>
    %c0_31 = arith.constant 0 : index
    %c0_32 = arith.constant 0 : index
    %70 = vector.load %arg6[%c0_31, %c0_32] : memref<8x128xf32, #tpu.memory_space<vmem>>, vector<8x128xf32>
    tpu.vector_store %arg6[%c0_31, %c0_32], %69 {strides = array<i32>} : memref<8x128xf32, #tpu.memory_space<vmem>>, vector<8x128xf32>,
    return
  }
  func.func @transform_0(%arg0: i32) -> (i32, i32, i32) {
    %c0_i32 = arith.constant 0 : i32
    %c0_i32_0 = arith.constant 0 : i32
    %c0_i32_1 = arith.constant 0 : i32
    return %arg0, %c0_i32, %c0_i32_0 : i32, i32, i32
  }
  func.func @transform_1(%arg0: i32) -> (i32, i32, i32) {
    %c0_i32 = arith.constant 0 : i32
    %c0_i32_0 = arith.constant 0 : i32
    %c0_i32_1 = arith.constant 0 : i32
    %c0_i32_2 = arith.constant 0 : i32
    return %c0_i32, %c0_i32_0, %c0_i32_1 : i32, i32, i32
  }
  func.func @transform_2(%arg0: i32) -> (i32, i32) {
    %c0_i32 = arith.constant 0 : i32
    %c0_i32_0 = arith.constant 0 : i32
    %c0_i32_1 = arith.constant 0 : i32
    return %c0_i32, %c0_i32_0 : i32, i32
  }
  func.func @transform_3(%arg0: i32) -> (i32, i32, i32) {
    %c0_i32 = arith.constant 0 : i32
    %c0_i32_0 = arith.constant 0 : i32
    %c0_i32_1 = arith.constant 0 : i32
    %c0_i32_2 = arith.constant 0 : i32
    return %c0_i32, %c0_i32_0, %c0_i32_1 : i32, i32, i32
  }
  func.func @transform_4(%arg0: i32) -> (i32, i32) {
    %c0_i32 = arith.constant 0 : i32
    %c0_i32_0 = arith.constant 0 : i32
    %c0_i32_1 = arith.constant 0 : i32
    return %c0_i32, %c0_i32_0 : i32, i32
  }
  func.func @transform_5(%arg0: i32) -> (i32, i32) {
    %c0_i32 = arith.constant 0 : i32
    %c0_i32_0 = arith.constant 0 : i32
    return %arg0, %c0_i32 : i32, i32
  }
}

</mosaic_0001>

<llo_original>
// kernel: tpu_custom_call.1
$region0: #{tpu_custom_call.1}
  #allocation0 [shape = 'u32[]', space=smem, size = 0x4, offset = 0x4, fixed_abs, tag = 'smem constant byte address 0x4 - core index']
  #allocation1 [shape = 'u32[144,128]{1,0:T(1,128)}', space=vmem, size = 0x12000, scoped, tag = 'internal scratch']
  %s0 = inlined_call_operand.hbm [shape: bf16[1,208,128], index: 0, kind: input, shape index: {}]
  %s1 = inlined_call_operand.hbm [shape: bf16[3,128,128], index: 1, kind: input, shape index: {}]
  %s2 = inlined_call_operand.vmem [shape: f32[1,128], index: 2, kind: input, shape index: {}]
  %s3 = inlined_call_operand.hbm [shape: bf16[4,64,128], index: 3, kind: input, shape index: {}]
  %s4 = inlined_call_operand.vmem [shape: f32[1,128], index: 4, kind: input, shape index: {}]
  %s5 = inlined_call_operand.hbm [shape: f32[8,128], index: 5, kind: output, shape index: {}]
  %s6 = sld [smem:[#allocation0]]
  $region42: #{tpu_custom_call.1} parent=0
    _
  %s8 = ssub.s32 1, %s6
  %s9 = scalar_select 0, %s8, %s6
  $region1: #{tpu_custom_call.1} parent=0
    #allocation2 [shape = 'u8[53248]{0}', space=vmem, size = 0xd000, scoped, tag = 'input window, operand 0, single buffered']
    #allocation3 [shape = 's32[1]{0}', space=sflag, size = 0x4, scoped, tag = 'scoped memory for tpu_custom_call.1']
    #allocation4 [shape = 's32[1]{0}', space=sflag, size = 0x4, scoped, tag = 'scoped memory for tpu_custom_call.1']
    #allocation5 [shape = 'u8[98304]{0}', space=vmem, size = 0x18000, scoped, tag = 'input window, operand 1, single buffered']
    #allocation6 [shape = 's32[1]{0}', space=sflag, size = 0x4, scoped, tag = 'scoped memory for tpu_custom_call.1']
    #allocation7 [shape = 'u8[65536]{0}', space=vmem, size = 0x10000, scoped, tag = 'input window, operand 3, single buffered']
    #allocation8 [shape = 'u8[4096]{0}', space=vmem, size = 0x1000, scoped, tag = 'output window, operand 0, single buffered']
    %10 = vsyncpa [#allocation3], 0
    %11 = vsyncpa [#allocation6], 0
    %12 = vsyncpa [#allocation4], 0
    // Predicated region
    $region2: #{tpu_custom_call.1} parent=1 // pred_check
      _
    $region3: #{tpu_custom_call.1} parent=1 // pred_check_branch
      %14 = sbr.rel (0) target = $region5
    $region4: #{tpu_custom_call.1} parent=1 // pred_region
      %s16 = ssub.s32 1664, 1664
      %17 = vsyncadd [#allocation3], %s16
      %s18 = sshll.u32 [#allocation2], 4
      %s19 = int_to_ptr.vmem [resolvable:$true] %s18
      %24 = dma.hbm_to_vmem [thread:$0]  %s0, 1664, %s19, [#allocation3], 64, 64, 4
    $region5: #{tpu_custom_call.1} parent=1 // pred_fallthru
      _
    // Predicated region
    $region6: #{tpu_custom_call.1} parent=1 // pred_check
      _
    $region7: #{tpu_custom_call.1} parent=1 // pred_check_branch
      %26 = sbr.rel (0) target = $region9
    $region8: #{tpu_custom_call.1} parent=1 // pred_region
      %s28 = ssub.s32 3072, 3072
      %29 = vsyncadd [#allocation6], %s28
      %s30 = sshll.u32 [#allocation5], 4
      %s31 = int_to_ptr.vmem [resolvable:$true] %s30
      %36 = dma.hbm_to_vmem [thread:$0]  %s1, 3072, %s31, [#allocation6], 64, 64, 4
    $region9: #{tpu_custom_call.1} parent=1 // pred_fallthru
      _
    // Predicated region
    $region10: #{tpu_custom_call.1} parent=1 // pred_check
      _
    $region11: #{tpu_custom_call.1} parent=1 // pred_check_branch
      %38 = sbr.rel (0) target = $region13
    $region12: #{tpu_custom_call.1} parent=1 // pred_region
      _
    $region13: #{tpu_custom_call.1} parent=1 // pred_fallthru
      _
    // Predicated region
    $region14: #{tpu_custom_call.1} parent=1 // pred_check
      _
    $region15: #{tpu_custom_call.1} parent=1 // pred_check_branch
      %40 = sbr.rel (0) target = $region17
    $region16: #{tpu_custom_call.1} parent=1 // pred_region
      %s42 = ssub.s32 2048, 2048
      %43 = vsyncadd [#allocation6], %s42
      %s44 = sshll.u32 [#allocation7], 4
      %s45 = int_to_ptr.vmem [resolvable:$true] %s44
      %50 = dma.hbm_to_vmem [thread:$0]  %s3, 2048, %s45, [#allocation6], 64, 64, 4
    $region17: #{tpu_custom_call.1} parent=1 // pred_fallthru
      _
    // Predicated region
    $region18: #{tpu_custom_call.1} parent=1 // pred_check
      _
    $region19: #{tpu_custom_call.1} parent=1 // pred_check_branch
      %52 = sbr.rel (0) target = $region21
    $region20: #{tpu_custom_call.1} parent=1 // pred_region
      _
    $region21: #{tpu_custom_call.1} parent=1 // pred_fallthru
      _
    // Predicated region
    $region22: #{tpu_custom_call.1} parent=1 // pred_check
      _
    $region23: #{tpu_custom_call.1} parent=1 // pred_check_branch
      %54 = sbr.rel (0) target = $region25
    $region24: #{tpu_custom_call.1} parent=1 // pred_region
      %55 = dma.done [#allocation3], 1664
    $region25: #{tpu_custom_call.1} parent=1 // pred_fallthru
      _
    // Predicated region
    $region26: #{tpu_custom_call.1} parent=1 // pred_check
      _
    $region27: #{tpu_custom_call.1} parent=1 // pred_check_branch
      %57 = sbr.rel (0) target = $region29
    $region28: #{tpu_custom_call.1} parent=1 // pred_region
      %58 = dma.done [#allocation6], 3072
    $region29: #{tpu_custom_call.1} parent=1 // pred_fallthru
      _
    // Predicated region
    $region30: #{tpu_custom_call.1} parent=1 // pred_check
      _
    $region31: #{tpu_custom_call.1} parent=1 // pred_check_branch
      %60 = sbr.rel (0) target = $region33
    $region32: #{tpu_custom_call.1} parent=1 // pred_region
      %61 = dma.done [#allocation6], 2048
    $region33: #{tpu_custom_call.1} parent=1 // pred_fallthru
      _
    %v63 = vld [vmem:[#allocation2] sm:$0xf]
    %v64 = vld [vmem:[#allocation2 + $0x4] sm:$0xf]
    %v65 = vld [vmem:[#allocation2 + $0x8] sm:$0xf]
    %v66 = vld [vmem:[#allocation2 + $0xc] sm:$0xf]
    %v67 = vld [vmem:[#allocation2 + $0x10] sm:$0xf]
    %v68 = vld [vmem:[#allocation2 + $0x14] sm:$0xf]
    %v69 = vld [vmem:[#allocation2 + $0x18] sm:$0xf]
    %v70 = vld [vmem:[#allocation2 + $0x1c] sm:$0xf]
    %v71 = vld [vmem:[#allocation2 + $0x20] sm:$0xf]
    %v72 = vld [vmem:[#allocation2 + $0x24] sm:$0xf]
    %v73 = vld [vmem:[#allocation2 + $0x28] sm:$0xf]
    %v74 = vld [vmem:[#allocation2 + $0x2c] sm:$0xf]
    %v75 = vld [vmem:[#allocation2 + $0x30] sm:$0xf]
    %v76 = vld [vmem:[#allocation2 + $0x34] sm:$0xf]
    %v77 = vld [vmem:[#allocation2 + $0x38] sm:$0xf]
    %v78 = vld [vmem:[#allocation2 + $0x3c] sm:$0xf]
    %v79 = vld [vmem:[#allocation2 + $0x40] sm:$0xf]
    %v80 = vld [vmem:[#allocation2 + $0x44] sm:$0xf]
    %v81 = vld [vmem:[#allocation2 + $0x48] sm:$0xf]
    %v82 = vld [vmem:[#allocation2 + $0x4c] sm:$0xf]
    %v83 = vld [vmem:[#allocation2 + $0x50] sm:$0xf]
    %v84 = vld [vmem:[#allocation2 + $0x54] sm:$0xf]
    %v85 = vld [vmem:[#allocation2 + $0x58] sm:$0xf]
    %v86 = vld [vmem:[#allocation2 + $0x5c] sm:$0xf]
    %v87 = vld [vmem:[#allocation2 + $0x60] sm:$0xf]
    %v88 = vld [vmem:[#allocation5] sm:$0xf]
    %v89 = vld [vmem:[#allocation5 + $0x4] sm:$0xf]
    %v90 = vld [vmem:[#allocation5 + $0x8] sm:$0xf]
    %v91 = vld [vmem:[#allocation5 + $0xc] sm:$0xf]
    %v92 = vld [vmem:[#allocation5 + $0x10] sm:$0xf]
    %v93 = vld [vmem:[#allocation5 + $0x14] sm:$0xf]
    %v94 = vld [vmem:[#allocation5 + $0x18] sm:$0xf]
    %v95 = vld [vmem:[#allocation5 + $0x1c] sm:$0xf]
    %v96 = vld [vmem:[#allocation5 + $0x20] sm:$0xf]
    %v97 = vld [vmem:[#allocation5 + $0x24] sm:$0xf]
    %v98 = vld [vmem:[#allocation5 + $0x28] sm:$0xf]
    %v99 = vld [vmem:[#allocation5 + $0x2c] sm:$0xf]
    %v100 = vld [vmem:[#allocation5 + $0x30] sm:$0xf]
    %v101 = vld [vmem:[#allocation5 + $0x34] sm:$0xf]
    %v102 = vld [vmem:[#allocation5 + $0x38] sm:$0xf]
    %v103 = vld [vmem:[#allocation5 + $0x3c] sm:$0xf]
    %s104 = scalar_lea.vmem [#allocation5], 64
    %v105 = vld [vmem:[%s104] sm:$0xf]
    %v106 = vld [vmem:[%s104 + $0x4] sm:$0xf]
    %v107 = vld [vmem:[%s104 + $0x8] sm:$0xf]
    %v108 = vld [vmem:[%s104 + $0xc] sm:$0xf]
    %v109 = vld [vmem:[%s104 + $0x10] sm:$0xf]
    %v110 = vld [vmem:[%s104 + $0x14] sm:$0xf]
    %v111 = vld [vmem:[%s104 + $0x18] sm:$0xf]
    %v112 = vld [vmem:[%s104 + $0x1c] sm:$0xf]
    %v113 = vld [vmem:[%s104 + $0x20] sm:$0xf]
    %v114 = vld [vmem:[%s104 + $0x24] sm:$0xf]
    %v115 = vld [vmem:[%s104 + $0x28] sm:$0xf]
    %v116 = vld [vmem:[%s104 + $0x2c] sm:$0xf]
    %v117 = vld [vmem:[%s104 + $0x30] sm:$0xf]
    %v118 = vld [vmem:[%s104 + $0x34] sm:$0xf]
    %v119 = vld [vmem:[%s104 + $0x38] sm:$0xf]
    %v120 = vld [vmem:[%s104 + $0x3c] sm:$0xf]
    %v146 = vunpack.c.l.b16 %v63
    %v147 = vunpack.c.l.b16 %v64
    %v148 = vunpack.c.l.b16 %v65
    %v149 = vunpack.c.l.b16 %v66
    %v150 = vunpack.c.l.b16 %v67
    %v151 = vunpack.c.l.b16 %v68
    %v152 = vunpack.c.l.b16 %v69
    %v153 = vunpack.c.l.b16 %v70
    %v154 = vunpack.c.l.b16 %v71
    %v155 = vunpack.c.l.b16 %v72
    %v156 = vunpack.c.l.b16 %v73
    %v157 = vunpack.c.l.b16 %v74
    %v158 = vunpack.c.l.b16 %v75
    %v159 = vunpack.c.l.b16 %v76
    %v160 = vunpack.c.l.b16 %v77
    %v161 = vunpack.c.l.b16 %v78
    %v162 = vunpack.c.l.b16 %v79
    %v163 = vunpack.c.l.b16 %v80
    %v164 = vunpack.c.l.b16 %v81
    %v165 = vunpack.c.l.b16 %v82
    %v166 = vunpack.c.l.b16 %v83
    %v167 = vunpack.c.l.b16 %v84
    %v168 = vunpack.c.l.b16 %v85
    %v169 = vunpack.c.l.b16 %v86
    %v170 = vunpack.c.l.b16 %v87
    %v171 = vpack.c.b16 %v147, %v146
    %v172 = vpack.c.b16 %v149, %v148
    %v173 = vpack.c.b16 %v151, %v150
    %v174 = vpack.c.b16 %v153, %v152
    %v175 = vpack.c.b16 %v155, %v154
    %v176 = vpack.c.b16 %v157, %v156
    %v177 = vpack.c.b16 %v159, %v158
    %v178 = vpack.c.b16 %v161, %v160
    %v179 = vpack.c.b16 %v163, %v162
    %v180 = vpack.c.b16 %v165, %v164
    %v181 = vpack.c.b16 %v167, %v166
    %v182 = vpack.c.b16 %v169, %v168
    %v183 = vpack.c.b16 %v170, %v170
    %vm184 = vsmask.f32 7424
    %v186 = vshrl.u32 %v171, 16
    %v188 = vshll.u32 %v171, 16
    %v190 = vrot.slane %v188, 1
    %v191 = vor.u32 %v186, %v190
    %v193 = vshll.u32 %v172, 16
    %v195 = vrot.slane %v193, 1
    %v196 = vsel %vm184, %v191, %v195
    %v197 = vshrl.u32 %v172, 16
    %v199 = vor.u32 %v197, %v195
    %v201 = vshll.u32 %v173, 16
    %v203 = vrot.slane %v201, 1
    %v204 = vsel %vm184, %v199, %v203
    %v205 = vshrl.u32 %v173, 16
    %v207 = vor.u32 %v205, %v203
    %v209 = vshll.u32 %v174, 16
    %v211 = vrot.slane %v209, 1
    %v212 = vsel %vm184, %v207, %v211
    %v213 = vshrl.u32 %v174, 16
    %v215 = vor.u32 %v213, %v211
    %v217 = vshll.u32 %v175, 16
    %v219 = vrot.slane %v217, 1
    %v220 = vsel %vm184, %v215, %v219
    %v221 = vshrl.u32 %v175, 16
    %v223 = vor.u32 %v221, %v219
    %v225 = vshll.u32 %v176, 16
    %v227 = vrot.slane %v225, 1
    %v228 = vsel %vm184, %v223, %v227
    %v229 = vshrl.u32 %v176, 16
    %v231 = vor.u32 %v229, %v227
    %v233 = vshll.u32 %v177, 16
    %v235 = vrot.slane %v233, 1
    %v236 = vsel %vm184, %v231, %v235
    %v237 = vshrl.u32 %v177, 16
    %v239 = vor.u32 %v237, %v235
    %v241 = vshll.u32 %v178, 16
    %v243 = vrot.slane %v241, 1
    %v244 = vsel %vm184, %v239, %v243
    %v245 = vshrl.u32 %v178, 16
    %v247 = vor.u32 %v245, %v243
    %v249 = vshll.u32 %v179, 16
    %v251 = vrot.slane %v249, 1
    %v252 = vsel %vm184, %v247, %v251
    %v253 = vshrl.u32 %v179, 16
    %v255 = vor.u32 %v253, %v251
    %v257 = vshll.u32 %v180, 16
    %v259 = vrot.slane %v257, 1
    %v260 = vsel %vm184, %v255, %v259
    %v261 = vshrl.u32 %v180, 16
    %v263 = vor.u32 %v261, %v259
    %v265 = vshll.u32 %v181, 16
    %v267 = vrot.slane %v265, 1
    %v268 = vsel %vm184, %v263, %v267
    %v269 = vshrl.u32 %v181, 16
    %v271 = vor.u32 %v269, %v267
    %v273 = vshll.u32 %v182, 16
    %v275 = vrot.slane %v273, 1
    %v276 = vsel %vm184, %v271, %v275
    %v277 = vshrl.u32 %v182, 16
    %v279 = vor.u32 %v277, %v275
    %v281 = vshll.u32 %v183, 16
    %v283 = vrot.slane %v281, 1
    %v284 = vsel %vm184, %v279, %v283
    %v285 = vshrl.u32 %v183, 16
    %v316 = vunpack.c.l.b16 %v105
    %v317 = vunpack.c.l.b16 %v106
    %v318 = vunpack.c.l.b16 %v107
    %v319 = vunpack.c.l.b16 %v108
    %v320 = vunpack.c.l.b16 %v109
    %v321 = vunpack.c.l.b16 %v110
    %v322 = vunpack.c.l.b16 %v111
    %v323 = vunpack.c.l.b16 %v112
    %v324 = vunpack.c.l.b16 %v113
    %v325 = vunpack.c.l.b16 %v114
    %v326 = vunpack.c.l.b16 %v115
    %v327 = vunpack.c.l.b16 %v116
    %v328 = vunpack.c.l.b16 %v117
    %v329 = vunpack.c.l.b16 %v118
    %v330 = vunpack.c.l.b16 %v119
    %v331 = vunpack.c.l.b16 %v120
    %v332 = vpack.c.b16 %v317, %v316
    %v333 = vpack.c.b16 %v319, %v318
    %v334 = vpack.c.b16 %v321, %v320
    %v335 = vpack.c.b16 %v323, %v322
    %v336 = vpack.c.b16 %v325, %v324
    %v337 = vpack.c.b16 %v327, %v326
    %v338 = vpack.c.b16 %v329, %v328
    %v339 = vpack.c.b16 %v331, %v330
    %348 = vmatprep.subr.bf16.mxu0 0
    %349 = vmatpush1.bf16.msra.mxu0 %v332
    %350 = vmatprep.subr.bf16.mxu0 0
    %351 = vmatpush1.bf16.msra.mxu0 %v333
    %352 = vmatprep.subr.bf16.mxu0 0
    %353 = vmatpush1.bf16.msra.mxu0 %v334
    %354 = vmatprep.subr.bf16.mxu0 0
    %355 = vmatpush1.bf16.msra.mxu0 %v335
    %356 = vmatprep.subr.bf16.mxu0 0
    %357 = vmatpush1.bf16.msra.mxu0 %v336
    %358 = vmatprep.subr.bf16.mxu0 0
    %359 = vmatpush1.bf16.msra.mxu0 %v337
    %360 = vmatprep.subr.bf16.mxu0 0
    %361 = vmatpush1.bf16.msra.mxu0 %v338
    %362 = vmatprep.subr.bf16.mxu0 0
    %363 = vmatpush1.bf16.msra.mxu0 %v339
    %364 = vmatprep.subr.bf16.mxu0 0
    %365 = vmatpush1.bf16.msra.mxu0 0
    %366 = vmatprep.subr.bf16.mxu0 0
    %367 = vmatpush1.bf16.msra.mxu0 0
    %368 = vmatprep.subr.bf16.mxu0 0
    %369 = vmatpush1.bf16.msra.mxu0 0
    %370 = vmatprep.subr.bf16.mxu0 0
    %371 = vmatpush1.bf16.msra.mxu0 0
    %372 = vmatprep.subr.bf16.mxu0 0
    %373 = vmatpush1.bf16.msra.mxu0 0
    %374 = vmatprep.subr.bf16.mxu0 0
    %375 = vmatpush1.bf16.msra.mxu0 0
    %376 = vmatprep.subr.bf16.mxu0 0
    %377 = vmatpush1.bf16.msra.mxu0 0
    %378 = vmatprep.subr.bf16.mxu0 0
    %379 = vmatpush1.bf16.msra.mxu0 0
    %380 = vmatprep.mubr.bf16.mxu0 0
    %381 = vmatmul.mubr.bf16.gmra.mrb[0].mxu0 %v196
    %v382 = vpop.f32.mrb[0].mxu0
    %v383 = vadd.f32 0.0, %v382
    %v384 = vpop.f32.mrb[0].mxu0
    %v385 = vpop.f32.mrb[0].mxu0
    %v386 = vadd.f32 0.0, %v385
    %v387 = vpop.f32.mrb[0].mxu0
    %388 = vmatprep.mubr.bf16.mxu0 0
    %389 = vmatmul.mubr.bf16.gmra.mrb[0].mxu0 %v204
    %v390 = vpop.f32.mrb[0].mxu0
    %v391 = vadd.f32 0.0, %v390
    %v392 = vpop.f32.mrb[0].mxu0
    %v393 = vpop.f32.mrb[0].mxu0
    %v394 = vadd.f32 0.0, %v393
    %v395 = vpop.f32.mrb[0].mxu0
    %396 = vmatprep.mubr.bf16.mxu0 0
    %397 = vmatmul.mubr.bf16.gmra.mrb[0].mxu0 %v212
    %v398 = vpop.f32.mrb[0].mxu0
    %v399 = vadd.f32 0.0, %v398
    %v400 = vpop.f32.mrb[0].mxu0
    %v401 = vpop.f32.mrb[0].mxu0
    %v402 = vadd.f32 0.0, %v401
    %v403 = vpop.f32.mrb[0].mxu0
    %404 = vmatprep.mubr.bf16.mxu0 0
    %405 = vmatmul.mubr.bf16.gmra.mrb[0].mxu0 %v220
    %v406 = vpop.f32.mrb[0].mxu0
    %v407 = vadd.f32 0.0, %v406
    %v408 = vpop.f32.mrb[0].mxu0
    %v409 = vpop.f32.mrb[0].mxu0
    %v410 = vadd.f32 0.0, %v409
    %v411 = vpop.f32.mrb[0].mxu0
    %412 = vmatprep.mubr.bf16.mxu0 0
    %413 = vmatmul.mubr.bf16.gmra.mrb[0].mxu0 %v228
    %v414 = vpop.f32.mrb[0].mxu0
    %v415 = vadd.f32 0.0, %v414
    %v416 = vpop.f32.mrb[0].mxu0
    %v417 = vpop.f32.mrb[0].mxu0
    %v418 = vadd.f32 0.0, %v417
    %v419 = vpop.f32.mrb[0].mxu0
    %420 = vmatprep.mubr.bf16.mxu0 0
    %421 = vmatmul.mubr.bf16.gmra.mrb[0].mxu0 %v236
    %v422 = vpop.f32.mrb[0].mxu0
    %v423 = vadd.f32 0.0, %v422
    %v424 = vpop.f32.mrb[0].mxu0
    %v425 = vpop.f32.mrb[0].mxu0
    %v426 = vadd.f32 0.0, %v425
    %v427 = vpop.f32.mrb[0].mxu0
    %428 = vmatprep.mubr.bf16.mxu0 0
    %429 = vmatmul.mubr.bf16.gmra.mrb[0].mxu0 %v244
    %v430 = vpop.f32.mrb[0].mxu0
    %v431 = vadd.f32 0.0, %v430
    %v432 = vpop.f32.mrb[0].mxu0
    %v433 = vpop.f32.mrb[0].mxu0
    %v434 = vadd.f32 0.0, %v433
    %v435 = vpop.f32.mrb[0].mxu0
    %436 = vmatprep.mubr.bf16.mxu0 0
    %437 = vmatmul.mubr.bf16.gmra.mrb[0].mxu0 %v252
    %v438 = vpop.f32.mrb[0].mxu0
    %v439 = vadd.f32 0.0, %v438
    %v440 = vpop.f32.mrb[0].mxu0
    %v441 = vpop.f32.mrb[0].mxu0
    %v442 = vadd.f32 0.0, %v441
    %v443 = vpop.f32.mrb[0].mxu0
    %444 = vmatprep.mubr.bf16.mxu0 0
    %445 = vmatmul.mubr.bf16.gmra.mrb[0].mxu0 %v260
    %v446 = vpop.f32.mrb[0].mxu0
    %v447 = vadd.f32 0.0, %v446
    %v448 = vpop.f32.mrb[0].mxu0
    %v449 = vpop.f32.mrb[0].mxu0
    %v450 = vadd.f32 0.0, %v449
    %v451 = vpop.f32.mrb[0].mxu0
    %452 = vmatprep.mubr.bf16.mxu0 0
    %453 = vmatmul.mubr.bf16.gmra.mrb[0].mxu0 %v268
    %v454 = vpop.f32.mrb[0].mxu0
    %v455 = vadd.f32 0.0, %v454
    %v456 = vpop.f32.mrb[0].mxu0
    %v457 = vpop.f32.mrb[0].mxu0
    %v458 = vadd.f32 0.0, %v457
    %v459 = vpop.f32.mrb[0].mxu0
    %460 = vmatprep.mubr.bf16.mxu0 0
    %461 = vmatmul.mubr.bf16.gmra.mrb[0].mxu0 %v276
    %v462 = vpop.f32.mrb[0].mxu0
    %v463 = vadd.f32 0.0, %v462
    %v464 = vpop.f32.mrb[0].mxu0
    %v465 = vpop.f32.mrb[0].mxu0
    %v466 = vadd.f32 0.0, %v465
    %v467 = vpop.f32.mrb[0].mxu0
    %468 = vmatprep.mubr.bf16.mxu0 0
    %469 = vmatmul.mubr.bf16.gmra.mrb[0].mxu0 %v284
    %v470 = vpop.f32.mrb[0].mxu0
    %v471 = vadd.f32 0.0, %v470
    %v472 = vpop.f32.mrb[0].mxu0
    %v473 = vpop.f32.mrb[0].mxu0
    %v474 = vadd.f32 0.0, %v473
    %v475 = vpop.f32.mrb[0].mxu0
    %476 = vmatprep.mubr.bf16.mxu0 0
    %477 = vmatmul.mubr.bf16.gmra.mrb[0].mxu0 %v285
    %v478 = vpop.f32.mrb[0].mxu0
    %v479 = vpop.f32.mrb[0].mxu0
    %v480 = vpop.f32.mrb[0].mxu0
    %v481 = vpop.f32.mrb[0].mxu0
    %482 = vdwg.mxu0
    %v512 = vunpack.c.l.b16 %v88
    %v513 = vunpack.c.l.b16 %v89
    %v514 = vunpack.c.l.b16 %v90
    %v515 = vunpack.c.l.b16 %v91
    %v516 = vunpack.c.l.b16 %v92
    %v517 = vunpack.c.l.b16 %v93
    %v518 = vunpack.c.l.b16 %v94
    %v519 = vunpack.c.l.b16 %v95
    %v520 = vunpack.c.l.b16 %v96
    %v521 = vunpack.c.l.b16 %v97
    %v522 = vunpack.c.l.b16 %v98
    %v523 = vunpack.c.l.b16 %v99
    %v524 = vunpack.c.l.b16 %v100
    %v525 = vunpack.c.l.b16 %v101
    %v526 = vunpack.c.l.b16 %v102
    %v527 = vunpack.c.l.b16 %v103
    %v528 = vpack.c.b16 %v513, %v512
    %v529 = vpack.c.b16 %v515, %v514
    %v530 = vpack.c.b16 %v517, %v516
    %v531 = vpack.c.b16 %v519, %v518
    %v532 = vpack.c.b16 %v521, %v520
    %v533 = vpack.c.b16 %v523, %v522
    %v534 = vpack.c.b16 %v525, %v524
    %v535 = vpack.c.b16 %v527, %v526
    %544 = vmatprep.subr.bf16.mxu0 0
    %545 = vmatpush1.bf16.msra.mxu0 %v528
    %546 = vmatprep.subr.bf16.mxu0 0
    %547 = vmatpush1.bf16.msra.mxu0 %v529
    %548 = vmatprep.subr.bf16.mxu0 0
    %549 = vmatpush1.bf16.msra.mxu0 %v530
    %550 = vmatprep.subr.bf16.mxu0 0
    %551 = vmatpush1.bf16.msra.mxu0 %v531
    %552 = vmatprep.subr.bf16.mxu0 0
    %553 = vmatpush1.bf16.msra.mxu0 %v532
    %554 = vmatprep.subr.bf16.mxu0 0
    %555 = vmatpush1.bf16.msra.mxu0 %v533
    %556 = vmatprep.subr.bf16.mxu0 0
    %557 = vmatpush1.bf16.msra.mxu0 %v534
    %558 = vmatprep.subr.bf16.mxu0 0
    %559 = vmatpush1.bf16.msra.mxu0 %v535
    %560 = vmatprep.subr.bf16.mxu0 0
    %561 = vmatpush1.bf16.msra.mxu0 0
    %562 = vmatprep.subr.bf16.mxu0 0
    %563 = vmatpush1.bf16.msra.mxu0 0
    %564 = vmatprep.subr.bf16.mxu0 0
    %565 = vmatpush1.bf16.msra.mxu0 0
    %566 = vmatprep.subr.bf16.mxu0 0
    %567 = vmatpush1.bf16.msra.mxu0 0
    %568 = vmatprep.subr.bf16.mxu0 0
    %569 = vmatpush1.bf16.msra.mxu0 0
    %570 = vmatprep.subr.bf16.mxu0 0
    %571 = vmatpush1.bf16.msra.mxu0 0
    %572 = vmatprep.subr.bf16.mxu0 0
    %573 = vmatpush1.bf16.msra.mxu0 0
    %574 = vmatprep.subr.bf16.mxu0 0
    %575 = vmatpush1.bf16.msra.mxu0 0
    %576 = vmatprep.mubr.bf16.mxu0 0
    %577 = vmatmul.mubr.bf16.gmra.mrb[0].mxu0 %v171
    %v578 = vpop.f32.mrb[0].mxu0
    %v579 = vadd.f32 %v383, %v578
    %v580 = vpop.f32.mrb[0].mxu0
    %v581 = vpop.f32.mrb[0].mxu0
    %v582 = vadd.f32 %v386, %v581
    %v583 = vpop.f32.mrb[0].mxu0
    %584 = vmatprep.mubr.bf16.mxu0 0
    %585 = vmatmul.mubr.bf16.gmra.mrb[0].mxu0 %v172
    %v586 = vpop.f32.mrb[0].mxu0
    %v587 = vadd.f32 %v391, %v586
    %v588 = vpop.f32.mrb[0].mxu0
    %v589 = vpop.f32.mrb[0].mxu0
    %v590 = vadd.f32 %v394, %v589
    %v591 = vpop.f32.mrb[0].mxu0
    %592 = vmatprep.mubr.bf16.mxu0 0
    %593 = vmatmul.mubr.bf16.gmra.mrb[0].mxu0 %v173
    %v594 = vpop.f32.mrb[0].mxu0
    %v595 = vadd.f32 %v399, %v594
    %v596 = vpop.f32.mrb[0].mxu0
    %v597 = vpop.f32.mrb[0].mxu0
    %v598 = vadd.f32 %v402, %v597
    %v599 = vpop.f32.mrb[0].mxu0
    %600 = vmatprep.mubr.bf16.mxu0 0
    %601 = vmatmul.mubr.bf16.gmra.mrb[0].mxu0 %v174
    %v602 = vpop.f32.mrb[0].mxu0
    %v603 = vadd.f32 %v407, %v602
    %v604 = vpop.f32.mrb[0].mxu0
    %v605 = vpop.f32.mrb[0].mxu0
    %v606 = vadd.f32 %v410, %v605
    %v607 = vpop.f32.mrb[0].mxu0
    %608 = vmatprep.mubr.bf16.mxu0 0
    %609 = vmatmul.mubr.bf16.gmra.mrb[0].mxu0 %v175
    %v610 = vpop.f32.mrb[0].mxu0
    %v611 = vadd.f32 %v415, %v610
    %v612 = vpop.f32.mrb[0].mxu0
    %v613 = vpop.f32.mrb[0].mxu0
    %v614 = vadd.f32 %v418, %v613
    %v615 = vpop.f32.mrb[0].mxu0
    %616 = vmatprep.mubr.bf16.mxu0 0
    %617 = vmatmul.mubr.bf16.gmra.mrb[0].mxu0 %v176
    %v618 = vpop.f32.mrb[0].mxu0
    %v619 = vadd.f32 %v423, %v618
    %v620 = vpop.f32.mrb[0].mxu0
    %v621 = vpop.f32.mrb[0].mxu0
    %v622 = vadd.f32 %v426, %v621
    %v623 = vpop.f32.mrb[0].mxu0
    %624 = vmatprep.mubr.bf16.mxu0 0
    %625 = vmatmul.mubr.bf16.gmra.mrb[0].mxu0 %v177
    %v626 = vpop.f32.mrb[0].mxu0
    %v627 = vadd.f32 %v431, %v626
    %v628 = vpop.f32.mrb[0].mxu0
    %v629 = vpop.f32.mrb[0].mxu0
    %v630 = vadd.f32 %v434, %v629
    %v631 = vpop.f32.mrb[0].mxu0
    %632 = vmatprep.mubr.bf16.mxu0 0
    %633 = vmatmul.mubr.bf16.gmra.mrb[0].mxu0 %v178
    %v634 = vpop.f32.mrb[0].mxu0
    %v635 = vadd.f32 %v439, %v634
    %v636 = vpop.f32.mrb[0].mxu0
    %v637 = vpop.f32.mrb[0].mxu0
    %v638 = vadd.f32 %v442, %v637
    %v639 = vpop.f32.mrb[0].mxu0
    %640 = vmatprep.mubr.bf16.mxu0 0
    %641 = vmatmul.mubr.bf16.gmra.mrb[0].mxu0 %v179
    %v642 = vpop.f32.mrb[0].mxu0
    %v643 = vadd.f32 %v447, %v642
    %v644 = vpop.f32.mrb[0].mxu0
    %v645 = vpop.f32.mrb[0].mxu0
    %v646 = vadd.f32 %v450, %v645
    %v647 = vpop.f32.mrb[0].mxu0
    %648 = vmatprep.mubr.bf16.mxu0 0
    %649 = vmatmul.mubr.bf16.gmra.mrb[0].mxu0 %v180
    %v650 = vpop.f32.mrb[0].mxu0
    %v651 = vadd.f32 %v455, %v650
    %v652 = vpop.f32.mrb[0].mxu0
    %v653 = vpop.f32.mrb[0].mxu0
    %v654 = vadd.f32 %v458, %v653
    %v655 = vpop.f32.mrb[0].mxu0
    %656 = vmatprep.mubr.bf16.mxu0 0
    %657 = vmatmul.mubr.bf16.gmra.mrb[0].mxu0 %v181
    %v658 = vpop.f32.mrb[0].mxu0
    %v659 = vadd.f32 %v463, %v658
    %v660 = vpop.f32.mrb[0].mxu0
    %v661 = vpop.f32.mrb[0].mxu0
    %v662 = vadd.f32 %v466, %v661
    %v663 = vpop.f32.mrb[0].mxu0
    %664 = vmatprep.mubr.bf16.mxu0 0
    %665 = vmatmul.mubr.bf16.gmra.mrb[0].mxu0 %v182
    %v666 = vpop.f32.mrb[0].mxu0
    %v667 = vadd.f32 %v471, %v666
    %v668 = vpop.f32.mrb[0].mxu0
    %v669 = vpop.f32.mrb[0].mxu0
    %v670 = vadd.f32 %v474, %v669
    %v671 = vpop.f32.mrb[0].mxu0
    %672 = vmatprep.mubr.bf16.mxu0 0
    %673 = vmatmul.mubr.bf16.gmra.mrb[0].mxu0 %v183
    %v674 = vpop.f32.mrb[0].mxu0
    %v675 = vpop.f32.mrb[0].mxu0
    %v676 = vpop.f32.mrb[0].mxu0
    %v677 = vpop.f32.mrb[0].mxu0
    %678 = vdwg.mxu0
    %s679 = scalar_lea.vmem [#allocation5], 128
    %v680 = vld [vmem:[%s679] sm:$0xf]
    %v681 = vld [vmem:[%s679 + $0x4] sm:$0xf]
    %v682 = vld [vmem:[%s679 + $0x8] sm:$0xf]
    %v683 = vld [vmem:[%s679 + $0xc] sm:$0xf]
    %v684 = vld [vmem:[%s679 + $0x10] sm:$0xf]
    %v685 = vld [vmem:[%s679 + $0x14] sm:$0xf]
    %v686 = vld [vmem:[%s679 + $0x18] sm:$0xf]
    %v687 = vld [vmem:[%s679 + $0x1c] sm:$0xf]
    %v688 = vld [vmem:[%s679 + $0x20] sm:$0xf]
    %v689 = vld [vmem:[%s679 + $0x24] sm:$0xf]
    %v690 = vld [vmem:[%s679 + $0x28] sm:$0xf]
    %v691 = vld [vmem:[%s679 + $0x2c] sm:$0xf]
    %v692 = vld [vmem:[%s679 + $0x30] sm:$0xf]
    %v693 = vld [vmem:[%s679 + $0x34] sm:$0xf]
    %v694 = vld [vmem:[%s679 + $0x38] sm:$0xf]
    %v695 = vld [vmem:[%s679 + $0x3c] sm:$0xf]
    %vm696 = vcmask 1046528
    %v697 = vrot.slane %v171, 1
    %v698 = vrot.slane %v172, 1
    %v699 = vsel %vm696, %v697, %v698
    %v700 = vrot.slane %v173, 1
    %v701 = vsel %vm696, %v698, %v700
    %v702 = vrot.slane %v174, 1
    %v703 = vsel %vm696, %v700, %v702
    %v704 = vrot.slane %v175, 1
    %v705 = vsel %vm696, %v702, %v704
    %v706 = vrot.slane %v176, 1
    %v707 = vsel %vm696, %v704, %v706
    %v708 = vrot.slane %v177, 1
    %v709 = vsel %vm696, %v706, %v708
    %v710 = vrot.slane %v178, 1
    %v711 = vsel %vm696, %v708, %v710
    %v712 = vrot.slane %v179, 1
    %v713 = vsel %vm696, %v710, %v712
    %v714 = vrot.slane %v180, 1
    %v715 = vsel %vm696, %v712, %v714
    %v716 = vrot.slane %v181, 1
    %v717 = vsel %vm696, %v714, %v716
    %v718 = vrot.slane %v182, 1
    %v719 = vsel %vm696, %v716, %v718
    %v720 = vrot.slane %v183, 1
    %v721 = vsel %vm696, %v718, %v720
    %v751 = vunpack.c.l.b16 %v680
    %v752 = vunpack.c.l.b16 %v681
    %v753 = vunpack.c.l.b16 %v682
    %v754 = vunpack.c.l.b16 %v683
    %v755 = vunpack.c.l.b16 %v684
    %v756 = vunpack.c.l.b16 %v685
    %v757 = vunpack.c.l.b16 %v686
    %v758 = vunpack.c.l.b16 %v687
    %v759 = vunpack.c.l.b16 %v688
    %v760 = vunpack.c.l.b16 %v689
    %v761 = vunpack.c.l.b16 %v690
    %v762 = vunpack.c.l.b16 %v691
    %v763 = vunpack.c.l.b16 %v692
    %v764 = vunpack.c.l.b16 %v693
    %v765 = vunpack.c.l.b16 %v694
    %v766 = vunpack.c.l.b16 %v695
    %v767 = vpack.c.b16 %v752, %v751
    %v768 = vpack.c.b16 %v754, %v753
    %v769 = vpack.c.b16 %v756, %v755
    %v770 = vpack.c.b16 %v758, %v757
    %v771 = vpack.c.b16 %v760, %v759
    %v772 = vpack.c.b16 %v762, %v761
    %v773 = vpack.c.b16 %v764, %v763
    %v774 = vpack.c.b16 %v766, %v765
    %783 = vmatprep.subr.bf16.mxu0 0
    %784 = vmatpush1.bf16.msra.mxu0 %v767
    %785 = vmatprep.subr.bf16.mxu0 0
    %786 = vmatpush1.bf16.msra.mxu0 %v768
    %787 = vmatprep.subr.bf16.mxu0 0
    %788 = vmatpush1.bf16.msra.mxu0 %v769
    %789 = vmatprep.subr.bf16.mxu0 0
    %790 = vmatpush1.bf16.msra.mxu0 %v770
    %791 = vmatprep.subr.bf16.mxu0 0
    %792 = vmatpush1.bf16.msra.mxu0 %v771
    %793 = vmatprep.subr.bf16.mxu0 0
    %794 = vmatpush1.bf16.msra.mxu0 %v772
    %795 = vmatprep.subr.bf16.mxu0 0
    %796 = vmatpush1.bf16.msra.mxu0 %v773
    %797 = vmatprep.subr.bf16.mxu0 0
    %798 = vmatpush1.bf16.msra.mxu0 %v774
    %799 = vmatprep.subr.bf16.mxu0 0
    %800 = vmatpush1.bf16.msra.mxu0 0
    %801 = vmatprep.subr.bf16.mxu0 0
    %802 = vmatpush1.bf16.msra.mxu0 0
    %803 = vmatprep.subr.bf16.mxu0 0
    %804 = vmatpush1.bf16.msra.mxu0 0
    %805 = vmatprep.subr.bf16.mxu0 0
    %806 = vmatpush1.bf16.msra.mxu0 0
    %807 = vmatprep.subr.bf16.mxu0 0
    %808 = vmatpush1.bf16.msra.mxu0 0
    %809 = vmatprep.subr.bf16.mxu0 0
    %810 = vmatpush1.bf16.msra.mxu0 0
    %811 = vmatprep.subr.bf16.mxu0 0
    %812 = vmatpush1.bf16.msra.mxu0 0
    %813 = vmatprep.subr.bf16.mxu0 0
    %814 = vmatpush1.bf16.msra.mxu0 0
    %815 = vmatprep.mubr.bf16.mxu0 0
    %816 = vmatmul.mubr.bf16.gmra.mrb[0].mxu0 %v699
    %v817 = vpop.f32.mrb[0].mxu0
    %v818 = vadd.f32 0.0, %v817
    %v819 = vpop.f32.mrb[0].mxu0
    %v820 = vpop.f32.mrb[0].mxu0
    %v821 = vadd.f32 0.0, %v820
    %v822 = vpop.f32.mrb[0].mxu0
    %823 = vmatprep.mubr.bf16.mxu0 0
    %824 = vmatmul.mubr.bf16.gmra.mrb[0].mxu0 %v701
    %v825 = vpop.f32.mrb[0].mxu0
    %v826 = vadd.f32 0.0, %v825
    %v827 = vpop.f32.mrb[0].mxu0
    %v828 = vpop.f32.mrb[0].mxu0
    %v829 = vadd.f32 0.0, %v828
    %v830 = vpop.f32.mrb[0].mxu0
    %831 = vmatprep.mubr.bf16.mxu0 0
    %832 = vmatmul.mubr.bf16.gmra.mrb[0].mxu0 %v703
    %v833 = vpop.f32.mrb[0].mxu0
    %v834 = vadd.f32 0.0, %v833
    %v835 = vpop.f32.mrb[0].mxu0
    %v836 = vpop.f32.mrb[0].mxu0
    %v837 = vadd.f32 0.0, %v836
    %v838 = vpop.f32.mrb[0].mxu0
    %839 = vmatprep.mubr.bf16.mxu0 0
    %840 = vmatmul.mubr.bf16.gmra.mrb[0].mxu0 %v705
    %v841 = vpop.f32.mrb[0].mxu0
    %v842 = vadd.f32 0.0, %v841
    %v843 = vpop.f32.mrb[0].mxu0
    %v844 = vpop.f32.mrb[0].mxu0
    %v845 = vadd.f32 0.0, %v844
    %v846 = vpop.f32.mrb[0].mxu0
    %847 = vmatprep.mubr.bf16.mxu0 0
    %848 = vmatmul.mubr.bf16.gmra.mrb[0].mxu0 %v707
    %v849 = vpop.f32.mrb[0].mxu0
    %v850 = vadd.f32 0.0, %v849
    %v851 = vpop.f32.mrb[0].mxu0
    %v852 = vpop.f32.mrb[0].mxu0
    %v853 = vadd.f32 0.0, %v852
    %v854 = vpop.f32.mrb[0].mxu0
    %855 = vmatprep.mubr.bf16.mxu0 0
    %856 = vmatmul.mubr.bf16.gmra.mrb[0].mxu0 %v709
    %v857 = vpop.f32.mrb[0].mxu0
    %v858 = vadd.f32 0.0, %v857
    %v859 = vpop.f32.mrb[0].mxu0
    %v860 = vpop.f32.mrb[0].mxu0
    %v861 = vadd.f32 0.0, %v860
    %v862 = vpop.f32.mrb[0].mxu0
    %863 = vmatprep.mubr.bf16.mxu0 0
    %864 = vmatmul.mubr.bf16.gmra.mrb[0].mxu0 %v711
    %v865 = vpop.f32.mrb[0].mxu0
    %v866 = vadd.f32 0.0, %v865
    %v867 = vpop.f32.mrb[0].mxu0
    %v868 = vpop.f32.mrb[0].mxu0
    %v869 = vadd.f32 0.0, %v868
    %v870 = vpop.f32.mrb[0].mxu0
    %871 = vmatprep.mubr.bf16.mxu0 0
    %872 = vmatmul.mubr.bf16.gmra.mrb[0].mxu0 %v713
    %v873 = vpop.f32.mrb[0].mxu0
    %v874 = vadd.f32 0.0, %v873
    %v875 = vpop.f32.mrb[0].mxu0
    %v876 = vpop.f32.mrb[0].mxu0
    %v877 = vadd.f32 0.0, %v876
    %v878 = vpop.f32.mrb[0].mxu0
    %879 = vmatprep.mubr.bf16.mxu0 0
    %880 = vmatmul.mubr.bf16.gmra.mrb[0].mxu0 %v715
    %v881 = vpop.f32.mrb[0].mxu0
    %v882 = vadd.f32 0.0, %v881
    %v883 = vpop.f32.mrb[0].mxu0
    %v884 = vpop.f32.mrb[0].mxu0
    %v885 = vadd.f32 0.0, %v884
    %v886 = vpop.f32.mrb[0].mxu0
    %887 = vmatprep.mubr.bf16.mxu0 0
    %888 = vmatmul.mubr.bf16.gmra.mrb[0].mxu0 %v717
    %v889 = vpop.f32.mrb[0].mxu0
    %v890 = vadd.f32 0.0, %v889
    %v891 = vpop.f32.mrb[0].mxu0
    %v892 = vpop.f32.mrb[0].mxu0
    %v893 = vadd.f32 0.0, %v892
    %v894 = vpop.f32.mrb[0].mxu0
    %895 = vmatprep.mubr.bf16.mxu0 0
    %896 = vmatmul.mubr.bf16.gmra.mrb[0].mxu0 %v719
    %v897 = vpop.f32.mrb[0].mxu0
    %v898 = vadd.f32 0.0, %v897
    %v899 = vpop.f32.mrb[0].mxu0
    %v900 = vpop.f32.mrb[0].mxu0
    %v901 = vadd.f32 0.0, %v900
    %v902 = vpop.f32.mrb[0].mxu0
    %903 = vmatprep.mubr.bf16.mxu0 0
    %904 = vmatmul.mubr.bf16.gmra.mrb[0].mxu0 %v721
    %v905 = vpop.f32.mrb[0].mxu0
    %v906 = vadd.f32 0.0, %v905
    %v907 = vpop.f32.mrb[0].mxu0
    %v908 = vpop.f32.mrb[0].mxu0
    %v909 = vadd.f32 0.0, %v908
    %v910 = vpop.f32.mrb[0].mxu0
    %911 = vmatprep.mubr.bf16.mxu0 0
    %912 = vmatmul.mubr.bf16.gmra.mrb[0].mxu0 %v720
    %v913 = vpop.f32.mrb[0].mxu0
    %v914 = vpop.f32.mrb[0].mxu0
    %v915 = vpop.f32.mrb[0].mxu0
    %v916 = vpop.f32.mrb[0].mxu0
    %917 = vdwg.mxu0
    %v918 = vadd.f32 %v579, %v818
    %v919 = vadd.f32 %v582, %v821
    %v920 = vadd.f32 %v587, %v826
    %v921 = vadd.f32 %v590, %v829
    %v922 = vadd.f32 %v595, %v834
    %v923 = vadd.f32 %v598, %v837
    %v924 = vadd.f32 %v603, %v842
    %v925 = vadd.f32 %v606, %v845
    %v926 = vadd.f32 %v611, %v850
    %v927 = vadd.f32 %v614, %v853
    %v928 = vadd.f32 %v619, %v858
    %v929 = vadd.f32 %v622, %v861
    %v930 = vadd.f32 %v627, %v866
    %v931 = vadd.f32 %v630, %v869
    %v932 = vadd.f32 %v635, %v874
    %v933 = vadd.f32 %v638, %v877
    %v934 = vadd.f32 %v643, %v882
    %v935 = vadd.f32 %v646, %v885
    %v936 = vadd.f32 %v651, %v890
    %v937 = vadd.f32 %v654, %v893
    %v938 = vadd.f32 %v659, %v898
    %v939 = vadd.f32 %v662, %v901
    %v940 = vadd.f32 %v667, %v906
    %v941 = vadd.f32 %v670, %v909
    %v942 = vld [vmem:[%s2] sm:$0x1]
    %v944 = vlaneseq
    %v945 = vshrl.u32 %v944, 7
    %v946 = vsub.s32 0, %v945
    %v947 = vrot.slane %v942, %v946
    %v949 = vadd.f32 %v918, %v947
    %v950 = vadd.f32 %v919, %v947
    %v951 = vadd.f32 %v920, %v947
    %v952 = vadd.f32 %v921, %v947
    %v953 = vadd.f32 %v922, %v947
    %v954 = vadd.f32 %v923, %v947
    %v955 = vadd.f32 %v924, %v947
    %v956 = vadd.f32 %v925, %v947
    %v957 = vadd.f32 %v926, %v947
    %v958 = vadd.f32 %v927, %v947
    %v959 = vadd.f32 %v928, %v947
    %v960 = vadd.f32 %v929, %v947
    %v961 = vadd.f32 %v930, %v947
    %v962 = vadd.f32 %v931, %v947
    %v963 = vadd.f32 %v932, %v947
    %v964 = vadd.f32 %v933, %v947
    %v965 = vadd.f32 %v934, %v947
    %v966 = vadd.f32 %v935, %v947
    %v967 = vadd.f32 %v936, %v947
    %v968 = vadd.f32 %v937, %v947
    %v969 = vadd.f32 %v938, %v947
    %v970 = vadd.f32 %v939, %v947
    %v971 = vadd.f32 %v940, %v947
    %v972 = vadd.f32 %v941, %v947
    %v973 = vmax.f32 %v949, 0.0
    %v974 = vmax.f32 %v950, 0.0
    %v975 = vmax.f32 %v951, 0.0
    %v976 = vmax.f32 %v952, 0.0
    %v977 = vmax.f32 %v953, 0.0
    %v978 = vmax.f32 %v954, 0.0
    %v979 = vmax.f32 %v955, 0.0
    %v980 = vmax.f32 %v956, 0.0
    %v981 = vmax.f32 %v957, 0.0
    %v982 = vmax.f32 %v958, 0.0
    %v983 = vmax.f32 %v959, 0.0
    %v984 = vmax.f32 %v960, 0.0
    %v985 = vmax.f32 %v961, 0.0
    %v986 = vmax.f32 %v962, 0.0
    %v987 = vmax.f32 %v963, 0.0
    %v988 = vmax.f32 %v964, 0.0
    %v989 = vmax.f32 %v965, 0.0
    %v990 = vmax.f32 %v966, 0.0
    %v991 = vmax.f32 %v967, 0.0
    %v992 = vmax.f32 %v968, 0.0
    %v993 = vmax.f32 %v969, 0.0
    %v994 = vmax.f32 %v970, 0.0
    %v995 = vmax.f32 %v971, 0.0
    %v996 = vmax.f32 %v972, 0.0
    %1021 = vrot.lane.b32.xlu0 %v973, 64
    %v1022 = vpop.permute.xlu0 %1021
    %1023 = vrot.lane.b32.xlu0 %v974, 64
    %v1024 = vpop.permute.xlu0 %1023
    %1025 = vrot.lane.b32.xlu0 %v975, 64
    %v1026 = vpop.permute.xlu0 %1025
    %1027 = vrot.lane.b32.xlu0 %v976, 64
    %v1028 = vpop.permute.xlu0 %1027
    %1029 = vrot.lane.b32.xlu0 %v977, 64
    %v1030 = vpop.permute.xlu0 %1029
    %1031 = vrot.lane.b32.xlu0 %v978, 64
    %v1032 = vpop.permute.xlu0 %1031
    %1033 = vrot.lane.b32.xlu0 %v979, 64
    %v1034 = vpop.permute.xlu0 %1033
    %1035 = vrot.lane.b32.xlu0 %v980, 64
    %v1036 = vpop.permute.xlu0 %1035
    %1037 = vrot.lane.b32.xlu0 %v981, 64
    %v1038 = vpop.permute.xlu0 %1037
    %1039 = vrot.lane.b32.xlu0 %v982, 64
    %v1040 = vpop.permute.xlu0 %1039
    %1041 = vrot.lane.b32.xlu0 %v983, 64
    %v1042 = vpop.permute.xlu0 %1041
    %1043 = vrot.lane.b32.xlu0 %v984, 64
    %v1044 = vpop.permute.xlu0 %1043
    %1045 = vrot.lane.b32.xlu0 %v985, 64
    %v1046 = vpop.permute.xlu0 %1045
    %1047 = vrot.lane.b32.xlu0 %v986, 64
    %v1048 = vpop.permute.xlu0 %1047
    %1049 = vrot.lane.b32.xlu0 %v987, 64
    %v1050 = vpop.permute.xlu0 %1049
    %1051 = vrot.lane.b32.xlu0 %v988, 64
    %v1052 = vpop.permute.xlu0 %1051
    %1053 = vrot.lane.b32.xlu0 %v989, 64
    %v1054 = vpop.permute.xlu0 %1053
    %1055 = vrot.lane.b32.xlu0 %v990, 64
    %v1056 = vpop.permute.xlu0 %1055
    %1057 = vrot.lane.b32.xlu0 %v991, 64
    %v1058 = vpop.permute.xlu0 %1057
    %1059 = vrot.lane.b32.xlu0 %v992, 64
    %v1060 = vpop.permute.xlu0 %1059
    %1061 = vrot.lane.b32.xlu0 %v993, 64
    %v1062 = vpop.permute.xlu0 %1061
    %1063 = vrot.lane.b32.xlu0 %v994, 64
    %v1064 = vpop.permute.xlu0 %1063
    %1065 = vrot.lane.b32.xlu0 %v995, 64
    %v1066 = vpop.permute.xlu0 %1065
    %1067 = vrot.lane.b32.xlu0 %v996, 64
    %v1068 = vpop.permute.xlu0 %1067
    %v1093 = vmax.f32 %v973, %v1022
    %v1094 = vmax.f32 %v974, %v1024
    %v1095 = vmax.f32 %v975, %v1026
    %v1096 = vmax.f32 %v976, %v1028
    %v1097 = vmax.f32 %v977, %v1030
    %v1098 = vmax.f32 %v978, %v1032
    %v1099 = vmax.f32 %v979, %v1034
    %v1100 = vmax.f32 %v980, %v1036
    %v1101 = vmax.f32 %v981, %v1038
    %v1102 = vmax.f32 %v982, %v1040
    %v1103 = vmax.f32 %v983, %v1042
    %v1104 = vmax.f32 %v984, %v1044
    %v1105 = vmax.f32 %v985, %v1046
    %v1106 = vmax.f32 %v986, %v1048
    %v1107 = vmax.f32 %v987, %v1050
    %v1108 = vmax.f32 %v988, %v1052
    %v1109 = vmax.f32 %v989, %v1054
    %v1110 = vmax.f32 %v990, %v1056
    %v1111 = vmax.f32 %v991, %v1058
    %v1112 = vmax.f32 %v992, %v1060
    %v1113 = vmax.f32 %v993, %v1062
    %v1114 = vmax.f32 %v994, %v1064
    %v1115 = vmax.f32 %v995, %v1066
    %v1116 = vmax.f32 %v996, %v1068
    %vm1141 = vcmask 1046528
    %v1142 = vrot.slane %v1093, 1
    %v1143 = vrot.slane %v1094, 1
    %v1144 = vsel %vm1141, %v1142, %v1143
    %v1145 = vrot.slane %v1095, 1
    %v1146 = vsel %vm1141, %v1143, %v1145
    %v1147 = vrot.slane %v1096, 1
    %v1148 = vrot.slane %v1097, 1
    %v1149 = vsel %vm1141, %v1147, %v1148
    %v1150 = vrot.slane %v1098, 1
    %v1151 = vsel %vm1141, %v1148, %v1150
    %v1152 = vrot.slane %v1099, 1
    %v1153 = vrot.slane %v1100, 1
    %v1154 = vsel %vm1141, %v1152, %v1153
    %v1155 = vrot.slane %v1101, 1
    %v1156 = vsel %vm1141, %v1153, %v1155
    %v1157 = vrot.slane %v1102, 1
    %v1158 = vrot.slane %v1103, 1
    %v1159 = vsel %vm1141, %v1157, %v1158
    %v1160 = vrot.slane %v1104, 1
    %v1161 = vsel %vm1141, %v1158, %v1160
    %v1162 = vrot.slane %v1105, 1
    %v1163 = vrot.slane %v1106, 1
    %v1164 = vsel %vm1141, %v1162, %v1163
    %v1165 = vrot.slane %v1107, 1
    %v1166 = vsel %vm1141, %v1163, %v1165
    %v1167 = vrot.slane %v1108, 1
    %v1168 = vrot.slane %v1109, 1
    %v1169 = vsel %vm1141, %v1167, %v1168
    %v1170 = vrot.slane %v1110, 1
    %v1171 = vsel %vm1141, %v1168, %v1170
    %v1172 = vrot.slane %v1111, 1
    %v1173 = vrot.slane %v1112, 1
    %v1174 = vsel %vm1141, %v1172, %v1173
    %v1175 = vrot.slane %v1113, 1
    %v1176 = vsel %vm1141, %v1173, %v1175
    %v1177 = vrot.slane %v1114, 1
    %v1178 = vrot.slane %v1115, 1
    %v1179 = vsel %vm1141, %v1177, %v1178
    %v1180 = vrot.slane %v1116, 1
    %v1181 = vsel %vm1141, %v1178, %v1180
    %v1198 = vmax.f32 %v1093, %v1144
    %v1199 = vmax.f32 %v1094, %v1146
    %v1200 = vmax.f32 %v1096, %v1149
    %v1201 = vmax.f32 %v1097, %v1151
    %v1202 = vmax.f32 %v1099, %v1154
    %v1203 = vmax.f32 %v1100, %v1156
    %v1204 = vmax.f32 %v1102, %v1159
    %v1205 = vmax.f32 %v1103, %v1161
    %v1206 = vmax.f32 %v1105, %v1164
    %v1207 = vmax.f32 %v1106, %v1166
    %v1208 = vmax.f32 %v1108, %v1169
    %v1209 = vmax.f32 %v1109, %v1171
    %v1210 = vmax.f32 %v1111, %v1174
    %v1211 = vmax.f32 %v1112, %v1176
    %v1212 = vmax.f32 %v1114, %v1179
    %v1213 = vmax.f32 %v1115, %v1181
    %v1222 = vrot.slane %v1198, 2
    %v1223 = vrot.slane %v1200, 2
    %v1224 = vrot.slane %v1202, 2
    %v1225 = vrot.slane %v1204, 2
    %v1226 = vrot.slane %v1206, 2
    %v1227 = vrot.slane %v1208, 2
    %v1228 = vrot.slane %v1210, 2
    %v1229 = vrot.slane %v1212, 2
    %v1238 = vadd.f32 %v1198, %v1222
    %v1239 = vadd.f32 %v1200, %v1223
    %v1240 = vadd.f32 %v1202, %v1224
    %v1241 = vadd.f32 %v1204, %v1225
    %v1242 = vadd.f32 %v1206, %v1226
    %v1243 = vadd.f32 %v1208, %v1227
    %v1244 = vadd.f32 %v1210, %v1228
    %v1245 = vadd.f32 %v1212, %v1229
    %v1246 = vpack.c.bf16 %v1238, %v1238
    %v1247 = vpack.c.bf16 %v1239, %v1239
    %v1248 = vpack.c.bf16 %v1240, %v1240
    %v1249 = vpack.c.bf16 %v1241, %v1241
    %v1250 = vpack.c.bf16 %v1242, %v1242
    %v1251 = vpack.c.bf16 %v1243, %v1243
    %v1252 = vpack.c.bf16 %v1244, %v1244
    %v1253 = vpack.c.bf16 %v1245, %v1245
    %v1254 = vld [vmem:[#allocation7] sm:$0xf]
    %v1255 = vld [vmem:[#allocation7 + $0x4] sm:$0xf]
    %v1256 = vld [vmem:[#allocation7 + $0x8] sm:$0xf]
    %v1257 = vld [vmem:[#allocation7 + $0xc] sm:$0xf]
    %v1258 = vld [vmem:[#allocation7 + $0x10] sm:$0xf]
    %v1259 = vld [vmem:[#allocation7 + $0x14] sm:$0xf]
    %v1260 = vld [vmem:[#allocation7 + $0x18] sm:$0xf]
    %v1261 = vld [vmem:[#allocation7 + $0x1c] sm:$0xf]
    %s1262 = scalar_lea.vmem [#allocation7], 32
    %v1263 = vld [vmem:[%s1262] sm:$0xf]
    %v1264 = vld [vmem:[%s1262 + $0x4] sm:$0xf]
    %v1265 = vld [vmem:[%s1262 + $0x8] sm:$0xf]
    %v1266 = vld [vmem:[%s1262 + $0xc] sm:$0xf]
    %v1267 = vld [vmem:[%s1262 + $0x10] sm:$0xf]
    %v1268 = vld [vmem:[%s1262 + $0x14] sm:$0xf]
    %v1269 = vld [vmem:[%s1262 + $0x18] sm:$0xf]
    %v1270 = vld [vmem:[%s1262 + $0x1c] sm:$0xf]
    %v1279 = vunpack.c.l.b16 %v1246
    %v1280 = vunpack.c.l.b16 %v1247
    %v1281 = vunpack.c.l.b16 %v1248
    %v1282 = vunpack.c.l.b16 %v1249
    %v1283 = vunpack.c.l.b16 %v1250
    %v1284 = vunpack.c.l.b16 %v1251
    %v1285 = vunpack.c.l.b16 %v1252
    %v1286 = vunpack.c.l.b16 %v1253
    %v1287 = vrot.slane %v1279, 4
    %v1288 = vrot.slane %v1280, 3
    %vm1289 = vcmask 1041409
    %v1290 = vsel %vm1289, %v1288, %v1287
    %v1291 = vrot.slane %v1281, 2
    %vm1292 = vcmask 1042434
    %v1293 = vsel %vm1292, %v1291, %v1290
    %v1294 = vrot.slane %v1282, 1
    %vm1295 = vcmask 1043459
    %v1296 = vsel %vm1295, %v1294, %v1293
    %vm1297 = vcmask 1044484
    %v1298 = vsel %vm1297, %v1283, %v1296
    %v1299 = vrot.slane %v1284, 7
    %vm1300 = vcmask 1045509
    %v1301 = vsel %vm1300, %v1299, %v1298
    %v1302 = vrot.slane %v1285, 6
    %vm1303 = vcmask 1046534
    %v1304 = vsel %vm1303, %v1302, %v1301
    %v1305 = vrot.slane %v1286, 5
    %vm1306 = vcmask 1047559
    %v1307 = vsel %vm1306, %v1305, %v1304
    %v1308 = vpack.c.b16 %v1307, %v1307
    %v1317 = vunpack.c.l.b16 %v1263
    %v1318 = vunpack.c.l.b16 %v1264
    %v1319 = vunpack.c.l.b16 %v1265
    %v1320 = vunpack.c.l.b16 %v1266
    %v1321 = vunpack.c.l.b16 %v1267
    %v1322 = vunpack.c.l.b16 %v1268
    %v1323 = vunpack.c.l.b16 %v1269
    %v1324 = vunpack.c.l.b16 %v1270
    %v1325 = vpack.c.b16 %v1318, %v1317
    %v1326 = vpack.c.b16 %v1320, %v1319
    %v1327 = vpack.c.b16 %v1322, %v1321
    %v1328 = vpack.c.b16 %v1324, %v1323
    %vm1333 = vcmask 523264
    %v1335 = vsel %vm1333, %v1308, 0
    %1337 = vmatprep.subr.bf16.mxu0 0
    %1338 = vmatpush1.bf16.msra.mxu0 %v1325
    %1339 = vmatprep.subr.bf16.mxu0 0
    %1340 = vmatpush1.bf16.msra.mxu0 %v1326
    %1341 = vmatprep.subr.bf16.mxu0 0
    %1342 = vmatpush1.bf16.msra.mxu0 %v1327
    %1343 = vmatprep.subr.bf16.mxu0 0
    %1344 = vmatpush1.bf16.msra.mxu0 %v1328
    %1345 = vmatprep.subr.bf16.mxu0 0
    %1346 = vmatpush1.bf16.msra.mxu0 0
    %1347 = vmatprep.subr.bf16.mxu0 0
    %1348 = vmatpush1.bf16.msra.mxu0 0
    %1349 = vmatprep.subr.bf16.mxu0 0
    %1350 = vmatpush1.bf16.msra.mxu0 0
    %1351 = vmatprep.subr.bf16.mxu0 0
    %1352 = vmatpush1.bf16.msra.mxu0 0
    %1353 = vmatprep.subr.bf16.mxu0 0
    %1354 = vmatpush1.bf16.msra.mxu0 0
    %1355 = vmatprep.subr.bf16.mxu0 0
    %1356 = vmatpush1.bf16.msra.mxu0 0
    %1357 = vmatprep.subr.bf16.mxu0 0
    %1358 = vmatpush1.bf16.msra.mxu0 0
    %1359 = vmatprep.subr.bf16.mxu0 0
    %1360 = vmatpush1.bf16.msra.mxu0 0
    %1361 = vmatprep.subr.bf16.mxu0 0
    %1362 = vmatpush1.bf16.msra.mxu0 0
    %1363 = vmatprep.subr.bf16.mxu0 0
    %1364 = vmatpush1.bf16.msra.mxu0 0
    %1365 = vmatprep.subr.bf16.mxu0 0
    %1366 = vmatpush1.bf16.msra.mxu0 0
    %1367 = vmatprep.subr.bf16.mxu0 0
    %1368 = vmatpush1.bf16.msra.mxu0 0
    %1369 = vmatprep.mubr.bf16.mxu0 0
    %1370 = vmatmul.mubr.bf16.gmra.mrb[0].mxu0 %v1335
    %v1371 = vpop.f32.mrb[0].mxu0
    %v1372 = vadd.f32 0.0, %v1371
    %v1373 = vpop.f32.mrb[0].mxu0
    %v1374 = vpop.f32.mrb[0].mxu0
    %v1375 = vpop.f32.mrb[0].mxu0
    %1376 = vdwg.mxu0
    %v1377 = vrot.slane %v1280, 7
    %v1378 = vsel %vm1289, %v1377, %v1279
    %v1379 = vrot.slane %v1281, 6
    %v1380 = vsel %vm1292, %v1379, %v1378
    %v1381 = vrot.slane %v1282, 5
    %v1382 = vsel %vm1295, %v1381, %v1380
    %v1383 = vrot.slane %v1283, 4
    %v1384 = vsel %vm1297, %v1383, %v1382
    %v1385 = vrot.slane %v1284, 3
    %v1386 = vsel %vm1300, %v1385, %v1384
    %v1387 = vrot.slane %v1285, 2
    %v1388 = vsel %vm1303, %v1387, %v1386
    %v1389 = vrot.slane %v1286, 1
    %v1390 = vsel %vm1306, %v1389, %v1388
    %v1391 = vpack.c.b16 %v1390, %v1390
    %v1400 = vunpack.c.l.b16 %v1254
    %v1401 = vunpack.c.l.b16 %v1255
    %v1402 = vunpack.c.l.b16 %v1256
    %v1403 = vunpack.c.l.b16 %v1257
    %v1404 = vunpack.c.l.b16 %v1258
    %v1405 = vunpack.c.l.b16 %v1259
    %v1406 = vunpack.c.l.b16 %v1260
    %v1407 = vunpack.c.l.b16 %v1261
    %v1408 = vpack.c.b16 %v1401, %v1400
    %v1409 = vpack.c.b16 %v1403, %v1402
    %v1410 = vpack.c.b16 %v1405, %v1404
    %v1411 = vpack.c.b16 %v1407, %v1406
    %v1417 = vsel %vm1333, %v1391, 0
    %1419 = vmatprep.subr.bf16.mxu0 0
    %1420 = vmatpush1.bf16.msra.mxu0 %v1408
    %1421 = vmatprep.subr.bf16.mxu0 0
    %1422 = vmatpush1.bf16.msra.mxu0 %v1409
    %1423 = vmatprep.subr.bf16.mxu0 0
    %1424 = vmatpush1.bf16.msra.mxu0 %v1410
    %1425 = vmatprep.subr.bf16.mxu0 0
    %1426 = vmatpush1.bf16.msra.mxu0 %v1411
    %1427 = vmatprep.subr.bf16.mxu0 0
    %1428 = vmatpush1.bf16.msra.mxu0 0
    %1429 = vmatprep.subr.bf16.mxu0 0
    %1430 = vmatpush1.bf16.msra.mxu0 0
    %1431 = vmatprep.subr.bf16.mxu0 0
    %1432 = vmatpush1.bf16.msra.mxu0 0
    %1433 = vmatprep.subr.bf16.mxu0 0
    %1434 = vmatpush1.bf16.msra.mxu0 0
    %1435 = vmatprep.subr.bf16.mxu0 0
    %1436 = vmatpush1.bf16.msra.mxu0 0
    %1437 = vmatprep.subr.bf16.mxu0 0
    %1438 = vmatpush1.bf16.msra.mxu0 0
    %1439 = vmatprep.subr.bf16.mxu0 0
    %1440 = vmatpush1.bf16.msra.mxu0 0
    %1441 = vmatprep.subr.bf16.mxu0 0
    %1442 = vmatpush1.bf16.msra.mxu0 0
    %1443 = vmatprep.subr.bf16.mxu0 0
    %1444 = vmatpush1.bf16.msra.mxu0 0
    %1445 = vmatprep.subr.bf16.mxu0 0
    %1446 = vmatpush1.bf16.msra.mxu0 0
    %1447 = vmatprep.subr.bf16.mxu0 0
    %1448 = vmatpush1.bf16.msra.mxu0 0
    %1449 = vmatprep.subr.bf16.mxu0 0
    %1450 = vmatpush1.bf16.msra.mxu0 0
    %1451 = vmatprep.mubr.bf16.mxu0 0
    %1452 = vmatmul.mubr.bf16.gmra.mrb[0].mxu0 %v1417
    %v1453 = vpop.f32.mrb[0].mxu0
    %v1454 = vadd.f32 %v1372, %v1453
    %v1455 = vpop.f32.mrb[0].mxu0
    %v1456 = vpop.f32.mrb[0].mxu0
    %v1457 = vpop.f32.mrb[0].mxu0
    %1458 = vdwg.mxu0
    %v1467 = vrot.slane %v1199, 2
    %v1468 = vrot.slane %v1201, 2
    %v1469 = vrot.slane %v1203, 2
    %v1470 = vrot.slane %v1205, 2
    %v1471 = vrot.slane %v1207, 2
    %v1472 = vrot.slane %v1209, 2
    %v1473 = vrot.slane %v1211, 2
    %v1474 = vrot.slane %v1213, 2
    %v1483 = vadd.f32 %v1199, %v1467
    %v1484 = vadd.f32 %v1201, %v1468
    %v1485 = vadd.f32 %v1203, %v1469
    %v1486 = vadd.f32 %v1205, %v1470
    %v1487 = vadd.f32 %v1207, %v1471
    %v1488 = vadd.f32 %v1209, %v1472
    %v1489 = vadd.f32 %v1211, %v1473
    %v1490 = vadd.f32 %v1213, %v1474
    %v1491 = vpack.c.bf16 %v1483, %v1483
    %v1492 = vpack.c.bf16 %v1484, %v1484
    %v1493 = vpack.c.bf16 %v1485, %v1485
    %v1494 = vpack.c.bf16 %v1486, %v1486
    %v1495 = vpack.c.bf16 %v1487, %v1487
    %v1496 = vpack.c.bf16 %v1488, %v1488
    %v1497 = vpack.c.bf16 %v1489, %v1489
    %v1498 = vpack.c.bf16 %v1490, %v1490
    %s1499 = scalar_lea.vmem [#allocation7], 64
    %v1500 = vld [vmem:[%s1499] sm:$0xf]
    %v1501 = vld [vmem:[%s1499 + $0x4] sm:$0xf]
    %v1502 = vld [vmem:[%s1499 + $0x8] sm:$0xf]
    %v1503 = vld [vmem:[%s1499 + $0xc] sm:$0xf]
    %v1504 = vld [vmem:[%s1499 + $0x10] sm:$0xf]
    %v1505 = vld [vmem:[%s1499 + $0x14] sm:$0xf]
    %v1506 = vld [vmem:[%s1499 + $0x18] sm:$0xf]
    %v1507 = vld [vmem:[%s1499 + $0x1c] sm:$0xf]
    %v1516 = vunpack.c.l.b16 %v1491
    %v1517 = vunpack.c.l.b16 %v1492
    %v1518 = vunpack.c.l.b16 %v1493
    %v1519 = vunpack.c.l.b16 %v1494
    %v1520 = vunpack.c.l.b16 %v1495
    %v1521 = vunpack.c.l.b16 %v1496
    %v1522 = vunpack.c.l.b16 %v1497
    %v1523 = vunpack.c.l.b16 %v1498
    %v1524 = vrot.slane %v1517, 7
    %v1525 = vsel %vm1289, %v1524, %v1516
    %v1526 = vrot.slane %v1518, 6
    %v1527 = vsel %vm1292, %v1526, %v1525
    %v1528 = vrot.slane %v1519, 5
    %v1529 = vsel %vm1295, %v1528, %v1527
    %v1530 = vrot.slane %v1520, 4
    %v1531 = vsel %vm1297, %v1530, %v1529
    %v1532 = vrot.slane %v1521, 3
    %v1533 = vsel %vm1300, %v1532, %v1531
    %v1534 = vrot.slane %v1522, 2
    %v1535 = vsel %vm1303, %v1534, %v1533
    %v1536 = vrot.slane %v1523, 1
    %v1537 = vsel %vm1306, %v1536, %v1535
    %v1538 = vpack.c.b16 %v1537, %v1537
    %v1547 = vunpack.c.l.b16 %v1500
    %v1548 = vunpack.c.l.b16 %v1501
    %v1549 = vunpack.c.l.b16 %v1502
    %v1550 = vunpack.c.l.b16 %v1503
    %v1551 = vunpack.c.l.b16 %v1504
    %v1552 = vunpack.c.l.b16 %v1505
    %v1553 = vunpack.c.l.b16 %v1506
    %v1554 = vunpack.c.l.b16 %v1507
    %v1555 = vpack.c.b16 %v1548, %v1547
    %v1556 = vpack.c.b16 %v1550, %v1549
    %v1557 = vpack.c.b16 %v1552, %v1551
    %v1558 = vpack.c.b16 %v1554, %v1553
    %v1564 = vsel %vm1333, %v1538, 0
    %1566 = vmatprep.subr.bf16.mxu0 0
    %1567 = vmatpush1.bf16.msra.mxu0 %v1555
    %1568 = vmatprep.subr.bf16.mxu0 0
    %1569 = vmatpush1.bf16.msra.mxu0 %v1556
    %1570 = vmatprep.subr.bf16.mxu0 0
    %1571 = vmatpush1.bf16.msra.mxu0 %v1557
    %1572 = vmatprep.subr.bf16.mxu0 0
    %1573 = vmatpush1.bf16.msra.mxu0 %v1558
    %1574 = vmatprep.subr.bf16.mxu0 0
    %1575 = vmatpush1.bf16.msra.mxu0 0
    %1576 = vmatprep.subr.bf16.mxu0 0
    %1577 = vmatpush1.bf16.msra.mxu0 0
    %1578 = vmatprep.subr.bf16.mxu0 0
    %1579 = vmatpush1.bf16.msra.mxu0 0
    %1580 = vmatprep.subr.bf16.mxu0 0
    %1581 = vmatpush1.bf16.msra.mxu0 0
    %1582 = vmatprep.subr.bf16.mxu0 0
    %1583 = vmatpush1.bf16.msra.mxu0 0
    %1584 = vmatprep.subr.bf16.mxu0 0
    %1585 = vmatpush1.bf16.msra.mxu0 0
    %1586 = vmatprep.subr.bf16.mxu0 0
    %1587 = vmatpush1.bf16.msra.mxu0 0
    %1588 = vmatprep.subr.bf16.mxu0 0
    %1589 = vmatpush1.bf16.msra.mxu0 0
    %1590 = vmatprep.subr.bf16.mxu0 0
    %1591 = vmatpush1.bf16.msra.mxu0 0
    %1592 = vmatprep.subr.bf16.mxu0 0
    %1593 = vmatpush1.bf16.msra.mxu0 0
    %1594 = vmatprep.subr.bf16.mxu0 0
    %1595 = vmatpush1.bf16.msra.mxu0 0
    %1596 = vmatprep.subr.bf16.mxu0 0
    %1597 = vmatpush1.bf16.msra.mxu0 0
    %1598 = vmatprep.mubr.bf16.mxu0 0
    %1599 = vmatmul.mubr.bf16.gmra.mrb[0].mxu0 %v1564
    %v1600 = vpop.f32.mrb[0].mxu0
    %v1601 = vadd.f32 0.0, %v1600
    %v1602 = vpop.f32.mrb[0].mxu0
    %v1603 = vpop.f32.mrb[0].mxu0
    %v1604 = vpop.f32.mrb[0].mxu0
    %1605 = vdwg.mxu0
    %v1606 = vadd.f32 %v1454, %v1601
    %s1607 = scalar_lea.vmem [#allocation7], 96
    %v1608 = vld [vmem:[%s1607] sm:$0xf]
    %v1609 = vld [vmem:[%s1607 + $0x4] sm:$0xf]
    %v1610 = vld [vmem:[%s1607 + $0x8] sm:$0xf]
    %v1611 = vld [vmem:[%s1607 + $0xc] sm:$0xf]
    %v1612 = vld [vmem:[%s1607 + $0x10] sm:$0xf]
    %v1613 = vld [vmem:[%s1607 + $0x14] sm:$0xf]
    %v1614 = vld [vmem:[%s1607 + $0x18] sm:$0xf]
    %v1615 = vld [vmem:[%s1607 + $0x1c] sm:$0xf]
    %v1616 = vrot.slane %v1516, 4
    %v1617 = vrot.slane %v1517, 3
    %v1618 = vsel %vm1289, %v1617, %v1616
    %v1619 = vrot.slane %v1518, 2
    %v1620 = vsel %vm1292, %v1619, %v1618
    %v1621 = vrot.slane %v1519, 1
    %v1622 = vsel %vm1295, %v1621, %v1620
    %v1623 = vsel %vm1297, %v1520, %v1622
    %v1624 = vrot.slane %v1521, 7
    %v1625 = vsel %vm1300, %v1624, %v1623
    %v1626 = vrot.slane %v1522, 6
    %v1627 = vsel %vm1303, %v1626, %v1625
    %v1628 = vrot.slane %v1523, 5
    %v1629 = vsel %vm1306, %v1628, %v1627
    %v1630 = vpack.c.b16 %v1629, %v1629
    %v1639 = vunpack.c.l.b16 %v1608
    %v1640 = vunpack.c.l.b16 %v1609
    %v1641 = vunpack.c.l.b16 %v1610
    %v1642 = vunpack.c.l.b16 %v1611
    %v1643 = vunpack.c.l.b16 %v1612
    %v1644 = vunpack.c.l.b16 %v1613
    %v1645 = vunpack.c.l.b16 %v1614
    %v1646 = vunpack.c.l.b16 %v1615
    %v1647 = vpack.c.b16 %v1640, %v1639
    %v1648 = vpack.c.b16 %v1642, %v1641
    %v1649 = vpack.c.b16 %v1644, %v1643
    %v1650 = vpack.c.b16 %v1646, %v1645
    %v1656 = vsel %vm1333, %v1630, 0
    %1658 = vmatprep.subr.bf16.mxu0 0
    %1659 = vmatpush1.bf16.msra.mxu0 %v1647
    %1660 = vmatprep.subr.bf16.mxu0 0
    %1661 = vmatpush1.bf16.msra.mxu0 %v1648
    %1662 = vmatprep.subr.bf16.mxu0 0
    %1663 = vmatpush1.bf16.msra.mxu0 %v1649
    %1664 = vmatprep.subr.bf16.mxu0 0
    %1665 = vmatpush1.bf16.msra.mxu0 %v1650
    %1666 = vmatprep.subr.bf16.mxu0 0
    %1667 = vmatpush1.bf16.msra.mxu0 0
    %1668 = vmatprep.subr.bf16.mxu0 0
    %1669 = vmatpush1.bf16.msra.mxu0 0
    %1670 = vmatprep.subr.bf16.mxu0 0
    %1671 = vmatpush1.bf16.msra.mxu0 0
    %1672 = vmatprep.subr.bf16.mxu0 0
    %1673 = vmatpush1.bf16.msra.mxu0 0
    %1674 = vmatprep.subr.bf16.mxu0 0
    %1675 = vmatpush1.bf16.msra.mxu0 0
    %1676 = vmatprep.subr.bf16.mxu0 0
    %1677 = vmatpush1.bf16.msra.mxu0 0
    %1678 = vmatprep.subr.bf16.mxu0 0
    %1679 = vmatpush1.bf16.msra.mxu0 0
    %1680 = vmatprep.subr.bf16.mxu0 0
    %1681 = vmatpush1.bf16.msra.mxu0 0
    %1682 = vmatprep.subr.bf16.mxu0 0
    %1683 = vmatpush1.bf16.msra.mxu0 0
    %1684 = vmatprep.subr.bf16.mxu0 0
    %1685 = vmatpush1.bf16.msra.mxu0 0
    %1686 = vmatprep.subr.bf16.mxu0 0
    %1687 = vmatpush1.bf16.msra.mxu0 0
    %1688 = vmatprep.subr.bf16.mxu0 0
    %1689 = vmatpush1.bf16.msra.mxu0 0
    %1690 = vmatprep.mubr.bf16.mxu0 0
    %1691 = vmatmul.mubr.bf16.gmra.mrb[0].mxu0 %v1656
    %v1692 = vpop.f32.mrb[0].mxu0
    %v1693 = vadd.f32 0.0, %v1692
    %v1694 = vpop.f32.mrb[0].mxu0
    %v1695 = vpop.f32.mrb[0].mxu0
    %v1696 = vpop.f32.mrb[0].mxu0
    %1697 = vdwg.mxu0
    %v1698 = vadd.f32 %v1606, %v1693
    %v1699 = vld [vmem:[%s4] sm:$0x1]
    %v1701 = vlaneseq
    %v1702 = vshrl.u32 %v1701, 7
    %v1703 = vsub.s32 0, %v1702
    %v1704 = vrot.slane %v1699, %v1703
    %v1706 = vadd.f32 %v1698, %v1704
    %1707 = vst [vmem:[#allocation8] sm:$0xff] %v1706
    // Predicated region
    $region34: #{tpu_custom_call.1} parent=1 // pred_check
      _
    $region35: #{tpu_custom_call.1} parent=1 // pred_check_branch
      %1709 = sbr.rel (0) target = $region37
    $region36: #{tpu_custom_call.1} parent=1 // pred_region
      %s1711 = ssub.s32 128, 128
      %1712 = vsyncadd [#allocation4], %s1711
      %s1714 = sshll.u32 [#allocation8], 4
      %s1715 = int_to_ptr.vmem [resolvable:$true] %s1714
      %1717 = dma.vmem_to_hbm [thread:$0]  %s1715, 128, %s5, [#allocation4]
    $region37: #{tpu_custom_call.1} parent=1 // pred_fallthru
      _
    // Predicated region
    $region38: #{tpu_custom_call.1} parent=1 // pred_check
      _
    $region39: #{tpu_custom_call.1} parent=1 // pred_check_branch
      %1719 = sbr.rel (0) target = $region41
    $region40: #{tpu_custom_call.1} parent=1 // pred_region
      %1720 = dma.done [#allocation4], 128
    $region41: #{tpu_custom_call.1} parent=1 // pred_fallthru
      _
    %1721 = vsyncpa [#allocation3], 1
    %1722 = vsyncpa [#allocation6], 1
    %1723 = vsyncpa [#allocation4], 1

</llo_original>
